<compile_context>
chip_gen: v6e
topology: v6e:2x2x1
jax: 0.10.0
libtpu: 0.0.40
codegen_flags: <defaults>
</compile_context>

<pallas_src>
import jax
import jax.numpy as jnp
from jax import lax
from jax.experimental import pallas as pl
from jax.experimental.pallas import tpu as pltpu


_MXU_DTYPE = jnp.bfloat16   # bf16 operands / f32 accumulation for the aggregation matmul


# ------------------------------- fused kernel --------------------------------

def _gnn_fused_kernel(
    src_ref, dst_ref, elsrc_ref, eldst_ref, inv_deg_ref,   # int32 indices + [N,1] 1/deg
    nodes_ref, edges_ref,                                  # node / edge features
    npw_ref, npb_ref, enw_ref, enb_ref,                    # node_proj, edge_nn (shared)
    c1b_ref, c2b_ref,                                      # NNConv biases
    epw1s_ref, epw1d_ref, epb1_ref, epw2_ref, epb2_ref,    # edge predictor (w1 split, w2 lane-padded)
    expand_ref, fold_ref,                                  # constant 0/1 repeat / fold matrices
    out_ref,                                               # [M, 128] padded logits
):
    f32 = jnp.float32
    N = nodes_ref.shape[0]
    E = edges_ref.shape[0]
    M = elsrc_ref.shape[0]

    # ---- node projection: h = node_feat @ W + b ------------------------------
    h = jnp.dot(nodes_ref[...], npw_ref[...], preferred_element_type=f32) + npb_ref[...]

    # ---- shared edge network: w_flat = relu(e @ W + b), lane-dense [E, H*H] --
    w_flat = jnp.dot(edges_ref[...], enw_ref[...], preferred_element_type=f32) + enb_ref[...]
    w_flat = jnp.maximum(w_flat, 0.0)

    # ---- graph operators built in-kernel from indices ------------------------
    # exact f32 gather operator: g_src[e, v] = 1 iff src[e] == v   (reused by both conv layers)
    g_src = (src_ref[...] == lax.broadcasted_iota(jnp.int32, (E, N), 1)).astype(f32)
    # exact 0/1 bf16 scatter operator: agg[v, e] = 1 iff dst[e] == v  (padded edges: dst = -1)
    agg = (dst_ref[...] == lax.broadcasted_iota(jnp.int32, (N, E), 0)).astype(_MXU_DTYPE)
    inv_deg = inv_deg_ref[...]                                                  # [N, 1] f32

    expand = expand_ref[...]                                                    # [H, H*H]
    fold = fold_ref[...]                                                        # [H*H, H]

    def nnconv(h_in, bias):
        # h_src[e, :] = h[src[e], :]                       (MXU gather)
        hsrc = jnp.dot(g_src, h_in, preferred_element_type=f32)                 # [E, H]
        # rep[e, i*H+j] = hsrc[e, i]                       (lane repeat via 0/1 matmul)
        rep = jnp.dot(hsrc, expand, preferred_element_type=f32)                 # [E, H*H]
        # fold BEFORE scatter: msg[e, j] = sum_i hsrc[e,i] * W_e[i,j]
        msg = jnp.dot(rep * w_flat, fold, preferred_element_type=f32)           # [E, H]
        # sum-scatter over dst with an exact 0/1 bf16 operand (dominant matmul)
        z = jnp.dot(agg, msg.astype(_MXU_DTYPE), preferred_element_type=f32)    # [N, H]
        # mean = sum * 1/deg applied as an f32 epilogue; + bias; F.relu
        return jnp.maximum(z * inv_deg + bias, 0.0)

    h = nnconv(h, c1b_ref[...])
    h = nnconv(h, c2b_ref[...])

    # ---- edge predictor on concat([h[src], h[dst]]) without the concat -------
    gs = (elsrc_ref[...] == lax.broadcasted_iota(jnp.int32, (M, N), 1)).astype(f32)
    gd = (eldst_ref[...] == lax.broadcasted_iota(jnp.int32, (M, N), 1)).astype(f32)
    src_h = jnp.dot(gs, h, preferred_element_type=f32)                          # [M, H]
    dst_h = jnp.dot(gd, h, preferred_element_type=f32)                          # [M, H]

    x = (jnp.dot(src_h, epw1s_ref[...], preferred_element_type=f32)
         + jnp.dot(dst_h, epw1d_ref[...], preferred_element_type=f32)
         + epb1_ref[...])
    x = jnp.maximum(x, 0.0)

    logits = jnp.dot(x, epw2_ref[...], preferred_element_type=f32) + epb2_ref[...]
    out_ref[...] = logits.astype(out_ref.dtype)                                 # [M, 128] lane-dense


def _full_spec(shape):
    zero = (0,) * len(shape)
    return pl.BlockSpec(shape, lambda i, _z=zero: _z)


def _round_up(x, m):
    return ((x + m - 1) // m) * m


# ------------------------------ model glue ------------------------------------

def init_params(key, in_feats, edge_feats, hidden, out_feats):
    H = hidden
    ks = jax.random.split(key, 8)

    def u(k, shape, fan_in):
        bound = 1.0 / jnp.sqrt(jnp.float32(fan_in))
        return jax.random.uniform(k, shape, jnp.float32, -bound, bound)

    return {
        "node_proj_w": u(ks[0], (in_feats, H), in_feats),
        "node_proj_b": u(ks[1], (1, H), in_feats),
        "edge_nn_w":   u(ks[2], (edge_feats, H * H), edge_feats),
        "edge_nn_b":   u(ks[3], (1, H * H), edge_feats),
        "conv1_b":     jnp.zeros((1, H), jnp.float32),   # DGL NNConv bias init = 0
        "conv2_b":     jnp.zeros((1, H), jnp.float32),
        "ep_w1":       u(ks[4], (2 * H, H), 2 * H),
        "ep_b1":       u(ks[5], (1, H), 2 * H),
        "ep_w2":       u(ks[6], (H, out_feats), H),
        "ep_b2":       u(ks[7], (1, out_feats), H),
    }


def gnn_forward(params, node_feat, edge_feat, src, dst, edge_list, *, hidden):
    H = hidden
    N = node_feat.shape[0]
    E = edge_feat.shape[0]
    M = edge_list.shape[0]
    out_feats = params["ep_w2"].shape[1]
    OUT_PAD = 128                                # lane-dense logits store

    # Static sublane padding: 16 rows for bf16-packed E operands, 8 rows for f32 N / M.
    Np = max(_round_up(N, 8), 8)
    Ep = max(_round_up(E, 16), 16)
    Mp = max(_round_up(M, 8), 8)

    node_p = jnp.zeros((Np, node_feat.shape[1]), jnp.float32).at[:N].set(node_feat)
    edge_p = jnp.zeros((Ep, edge_feat.shape[1]), jnp.float32).at[:E].set(edge_feat)

    src_i = src.astype(jnp.int32)
    dst_i = dst.astype(jnp.int32)
    src_p = jnp.zeros((Ep,), jnp.int32).at[:E].set(src_i)        # padded edges gather node 0 (harmless)
    dst_p = jnp.full((Ep,), -1, jnp.int32).at[:E].set(dst_i)     # dst = -1 => excluded from the mean
    elsrc_p = jnp.zeros((Mp,), jnp.int32).at[:M].set(edge_list[:, 0].astype(jnp.int32))
    eldst_p = jnp.zeros((Mp,), jnp.int32).at[:M].set(edge_list[:, 1].astype(jnp.int32))

    # In-degree / mean scaling computed wrapper-side (negligible HBM, off the kernel path).
    deg = jnp.zeros((Np,), jnp.float32).at[dst_i].add(1.0)
    inv_deg = (1.0 / jnp.maximum(deg, 1.0)).reshape(Np, 1)

    # Constant 0/1 repeat / fold operators for the lane-dense NNConv formulation.
    eye = jnp.eye(H, dtype=jnp.float32)
    expand = jnp.repeat(eye, H, axis=1)          # [H, H*H]:  expand[i, i*H+j] = 1
    fold = jnp.tile(eye, (H, 1))                 # [H*H, H]:  fold[i*H+j, j]   = 1

    # Split ep_w1 wrapper-side (avoids an in-kernel sublane slice) and pad the final
    # projection to 128 output lanes (unmasked vector stores).
    epw1s = params["ep_w1"][:H, :]
    epw1d = params["ep_w1"][H:, :]
    epw2 = jnp.zeros((H, OUT_PAD), jnp.float32).at[:, :out_feats].set(params["ep_w2"])
    epb2 = jnp.zeros((1, OUT_PAD), jnp.float32).at[:, :out_feats].set(params["ep_b2"])

    inputs = (
        src_p.reshape(Ep, 1), dst_p.reshape(1, Ep),
        elsrc_p.reshape(Mp, 1), eldst_p.reshape(Mp, 1),
        inv_deg,
        node_p, edge_p,
        params["node_proj_w"], params["node_proj_b"],
        params["edge_nn_w"], params["edge_nn_b"],
        params["conv1_b"], params["conv2_b"],
        epw1s, epw1d, params["ep_b1"], epw2, epb2,
        expand, fold,
    )

    out = pl.pallas_call(
        _gnn_fused_kernel,
        out_shape=jax.ShapeDtypeStruct((Mp, OUT_PAD), jnp.float32),
        grid=(1,),
        in_specs=[_full_spec(x.shape) for x in inputs],
        out_specs=_full_spec((Mp, OUT_PAD)),
        compiler_params=pltpu.CompilerParams(dimension_semantics=("arbitrary",)),
    )(*inputs)

    return out[:M, :out_feats]


# --------------------------------- demo ---------------------------------------

if __name__ == "__main__":
    in_feats, edge_feats, hidden, out_feats = 8, 4, 16, 2
    N, E = 16, 24

    key = jax.random.PRNGKey(0)
    k1, k2, k3, k4, kp = jax.random.split(key, 5)

    node_feat = jax.random.normal(k1, (N, in_feats), jnp.float32)
    edge_feat = jax.random.normal(k2, (E, edge_feats), jnp.float32)
    src = jax.random.randint(k3, (E,), 0, N)
    dst = jax.random.randint(k4, (E,), 0, N)
    edge_list = jnp.stack([src, dst], axis=1)          # predict on the graph's edges

    params = init_params(kp, in_feats, edge_feats, hidden, out_feats)

    fwd = jax.jit(gnn_forward, static_argnames="hidden")
    logits = fwd(params, node_feat, edge_feat, src, dst, edge_list, hidden=hidden)
    jax.block_until_ready(logits)
    assert logits.shape == (E, out_feats) and logits.dtype == jnp.float32

    print("KERNEL_OK")
</pallas_src>

<mosaic_0001>
module attributes {stable_mosaic.version = 11 : i64} {
  func.func private @main(%arg0: i32) attributes {dimension_semantics = [#tpu.dimension_semantics<core_parallel>], iteration_bounds = array<i64: 2>, tpu.core_type = #tpu.core_type<sc_scalar_subcore>, window_params = []} {
    return
  }
}

module attributes {stable_mosaic.version = 11 : i64} {
  func.func private @main(%arg0: i32) attributes {dimension_semantics = [#tpu.dimension_semantics<core_parallel>], iteration_bounds = array<i64: 2>, tpu.core_type = #tpu.core_type<sc_scalar_subcore>, window_params = []} {
    return
  }
}

module attributes {stable_mosaic.version = 11 : i64} {
  func.func @_gnn_fused_kernel(%arg0: i32, %arg1: memref<32x1xi32, #tpu.memory_space<vmem>>, %arg2: memref<1x32xi32, #tpu.memory_space<vmem>>, %arg3: memref<24x1xi32, #tpu.memory_space<vmem>>, %arg4: memref<24x1xi32, #tpu.memory_space<vmem>>, %arg5: memref<16x1xf32, #tpu.memory_space<vmem>>, %arg6: memref<16x8xf32, #tpu.memory_space<vmem>>, %arg7: memref<32x4xf32, #tpu.memory_space<vmem>>, %arg8: memref<8x16xf32, #tpu.memory_space<vmem>>, %arg9: memref<1x16xf32, #tpu.memory_space<vmem>>, %arg10: memref<4x256xf32, #tpu.memory_space<vmem>>, %arg11: memref<1x256xf32, #tpu.memory_space<vmem>>, %arg12: memref<1x16xf32, #tpu.memory_space<vmem>>, %arg13: memref<1x16xf32, #tpu.memory_space<vmem>>, %arg14: memref<16x16xf32, #tpu.memory_space<vmem>>, %arg15: memref<16x16xf32, #tpu.memory_space<vmem>>, %arg16: memref<1x16xf32, #tpu.memory_space<vmem>>, %arg17: memref<16x128xf32, #tpu.memory_space<vmem>>, %arg18: memref<1x128xf32, #tpu.memory_space<vmem>>, %arg19: memref<16x256xf32, #tpu.memory_space<vmem>>, %arg20: memref<256x16xf32, #tpu.memory_space<vmem>>, %arg21: memref<24x128xf32, #tpu.memory_space<vmem>>) attributes {dimension_semantics = [#tpu.dimension_semantics<arbitrary>], iteration_bounds = array<i64: 1>, scalar_prefetch = 0 : i64, scratch_operands = 0 : i64, tpu.core_type = #tpu.core_type<tc>, window_params = [{pipeline_mode = #tpu.pipeline_mode<synchronous>, transform_indices = @transform_0, window_bounds = array<i64: 32, 1>}, {pipeline_mode = #tpu.pipeline_mode<synchronous>, transform_indices = @transform_1, window_bounds = array<i64: 1, 32>}, {pipeline_mode = #tpu.pipeline_mode<synchronous>, transform_indices = @transform_2, window_bounds = array<i64: 24, 1>}, {pipeline_mode = #tpu.pipeline_mode<synchronous>, transform_indices = @transform_3, window_bounds = array<i64: 24, 1>}, {pipeline_mode = #tpu.pipeline_mode<synchronous>, transform_indices = @transform_4, window_bounds = array<i64: 16, 1>}, {pipeline_mode = #tpu.pipeline_mode<synchronous>, transform_indices = @transform_5, window_bounds = array<i64: 16, 8>}, {pipeline_mode = #tpu.pipeline_mode<synchronous>, transform_indices = @transform_6, window_bounds = array<i64: 32, 4>}, {pipeline_mode = #tpu.pipeline_mode<synchronous>, transform_indices = @transform_7, window_bounds = array<i64: 8, 16>}, {pipeline_mode = #tpu.pipeline_mode<synchronous>, transform_indices = @transform_8, window_bounds = array<i64: 1, 16>}, {pipeline_mode = #tpu.pipeline_mode<synchronous>, transform_indices = @transform_9, window_bounds = array<i64: 4, 256>}, {pipeline_mode = #tpu.pipeline_mode<synchronous>, transform_indices = @transform_10, window_bounds = array<i64: 1, 256>}, {pipeline_mode = #tpu.pipeline_mode<synchronous>, transform_indices = @transform_11, window_bounds = array<i64: 1, 16>}, {pipeline_mode = #tpu.pipeline_mode<synchronous>, transform_indices = @transform_12, window_bounds = array<i64: 1, 16>}, {pipeline_mode = #tpu.pipeline_mode<synchronous>, transform_indices = @transform_13, window_bounds = array<i64: 16, 16>}, {pipeline_mode = #tpu.pipeline_mode<synchronous>, transform_indices = @transform_14, window_bounds = array<i64: 16, 16>}, {pipeline_mode = #tpu.pipeline_mode<synchronous>, transform_indices = @transform_15, window_bounds = array<i64: 1, 16>}, {pipeline_mode = #tpu.pipeline_mode<synchronous>, transform_indices = @transform_16, window_bounds = array<i64: 16, 128>}, {pipeline_mode = #tpu.pipeline_mode<synchronous>, transform_indices = @transform_17, window_bounds = array<i64: 1, 128>}, {pipeline_mode = #tpu.pipeline_mode<synchronous>, transform_indices = @transform_18, window_bounds = array<i64: 16, 256>}, {pipeline_mode = #tpu.pipeline_mode<synchronous>, transform_indices = @transform_19, window_bounds = array<i64: 256, 16>}, {pipeline_mode = #tpu.pipeline_mode<synchronous>, transform_indices = @transform_20, window_bounds = array<i64: 24, 128>}]} {
    %c0 = arith.constant 0 : index
    %c0_0 = arith.constant 0 : index
    %0 = vector.load %arg6[%c0, %c0_0] : memref<16x8xf32, #tpu.memory_space<vmem>>, vector<16x8xf32>
    %c0_1 = arith.constant 0 : index
    %c0_2 = arith.constant 0 : index
    %1 = vector.load %arg8[%c0_1, %c0_2] : memref<8x16xf32, #tpu.memory_space<vmem>>, vector<8x16xf32>
    %cst = arith.constant dense<0.000000e+00> : vector<16x16xf32>
    %2 = tpu.matmul %0, %1, %cst {dimension_numbers = #tpu.dot_dimension_numbers<[1], [0], [0], [1], [0, 0, 1, 1], [], []>} : vector<16x8xf32>, vector<8x16xf32>, vector<16x16xf32> -> vector<16x16xf32>
    %c0_3 = arith.constant 0 : index
    %c0_4 = arith.constant 0 : index
    %3 = vector.load %arg9[%c0_3, %c0_4] : memref<1x16xf32, #tpu.memory_space<vmem>>, vector<1x16xf32>
    %4 = vector.broadcast %3 : vector<1x16xf32> to vector<16x16xf32>
    %5 = arith.addf %2, %4 : vector<16x16xf32>
    %c0_5 = arith.constant 0 : index
    %c0_6 = arith.constant 0 : index
    %6 = vector.load %arg7[%c0_5, %c0_6] : memref<32x4xf32, #tpu.memory_space<vmem>>, vector<32x4xf32>
    %c0_7 = arith.constant 0 : index
    %c0_8 = arith.constant 0 : index
    %7 = vector.load %arg10[%c0_7, %c0_8] : memref<4x256xf32, #tpu.memory_space<vmem>>, vector<4x256xf32>
    %cst_9 = arith.constant dense<0.000000e+00> : vector<32x256xf32>
    %8 = tpu.matmul %6, %7, %cst_9 {dimension_numbers = #tpu.dot_dimension_numbers<[1], [0], [0], [1], [0, 0, 1, 1], [], []>} : vector<32x4xf32>, vector<4x256xf32>, vector<32x256xf32> -> vector<32x256xf32>
    %c0_10 = arith.constant 0 : index
    %c0_11 = arith.constant 0 : index
    %9 = vector.load %arg11[%c0_10, %c0_11] : memref<1x256xf32, #tpu.memory_space<vmem>>, vector<1x256xf32>
    %10 = vector.broadcast %9 : vector<1x256xf32> to vector<32x256xf32>
    %11 = arith.addf %8, %10 : vector<32x256xf32>
    %cst_12 = arith.constant 0.000000e+00 : f32
    %12 = vector.broadcast %cst_12 : f32 to vector<32x256xf32>
    %13 = arith.maximumf %11, %12 : vector<32x256xf32>
    %c0_13 = arith.constant 0 : index
    %c0_14 = arith.constant 0 : index
    %14 = vector.load %arg1[%c0_13, %c0_14] : memref<32x1xi32, #tpu.memory_space<vmem>>, vector<32x1xi32>
    %15 = tpu.iota {dimensions = array<i32: 1>} : vector<32x16xi32>
    %16 = vector.broadcast %14 : vector<32x1xi32> to vector<32x16xi32>
    %17 = arith.cmpi eq, %16, %15 : vector<32x16xi32>
    %18 = arith.extui %17 : vector<32x16xi1> to vector<32x16xi32>
    %19 = arith.sitofp %18 : vector<32x16xi32> to vector<32x16xf32>
    %c0_15 = arith.constant 0 : index
    %c0_16 = arith.constant 0 : index
    %20 = vector.load %arg2[%c0_15, %c0_16] : memref<1x32xi32, #tpu.memory_space<vmem>>, vector<1x32xi32>
    %21 = tpu.iota {dimensions = array<i32: 0>} : vector<16x32xi32>
    %22 = vector.broadcast %20 : vector<1x32xi32> to vector<16x32xi32>
    %23 = arith.cmpi eq, %22, %21 : vector<16x32xi32>
    %24 = arith.extui %23 : vector<16x32xi1> to vector<16x32xi32>
    %25 = arith.sitofp %24 : vector<16x32xi32> to vector<16x32xf32>
    %26 = arith.truncf %25 : vector<16x32xf32> to vector<16x32xbf16>
    %c0_17 = arith.constant 0 : index
    %c0_18 = arith.constant 0 : index
    %27 = vector.load %arg5[%c0_17, %c0_18] : memref<16x1xf32, #tpu.memory_space<vmem>>, vector<16x1xf32>
    %c0_19 = arith.constant 0 : index
    %c0_20 = arith.constant 0 : index
    %28 = vector.load %arg19[%c0_19, %c0_20] : memref<16x256xf32, #tpu.memory_space<vmem>>, vector<16x256xf32>
    %c0_21 = arith.constant 0 : index
    %c0_22 = arith.constant 0 : index
    %29 = vector.load %arg20[%c0_21, %c0_22] : memref<256x16xf32, #tpu.memory_space<vmem>>, vector<256x16xf32>
    %c0_23 = arith.constant 0 : index
    %c0_24 = arith.constant 0 : index
    %30 = vector.load %arg12[%c0_23, %c0_24] : memref<1x16xf32, #tpu.memory_space<vmem>>, vector<1x16xf32>
    %cst_25 = arith.constant dense<0.000000e+00> : vector<32x16xf32>
    %31 = tpu.matmul %19, %5, %cst_25 {dimension_numbers = #tpu.dot_dimension_numbers<[1], [0], [0], [1], [0, 0, 1, 1], [], []>} : vector<32x16xf32>, vector<16x16xf32>, vector<32x16xf32> -> vector<32x16xf32>
    %cst_26 = arith.constant dense<0.000000e+00> : vector<32x256xf32>
    %32 = tpu.matmul %31, %28, %cst_26 {dimension_numbers = #tpu.dot_dimension_numbers<[1], [0], [0], [1], [0, 0, 1, 1], [], []>} : vector<32x16xf32>, vector<16x256xf32>, vector<32x256xf32> -> vector<32x256xf32>
    %33 = arith.mulf %32, %13 : vector<32x256xf32>
    %cst_27 = arith.constant dense<0.000000e+00> : vector<32x16xf32>
    %34 = tpu.matmul %33, %29, %cst_27 {dimension_numbers = #tpu.dot_dimension_numbers<[1], [0], [0], [1], [0, 0, 1, 1], [], []>} : vector<32x256xf32>, vector<256x16xf32>, vector<32x16xf32> -> vector<32x16xf32>
    %35 = arith.truncf %34 : vector<32x16xf32> to vector<32x16xbf16>
    %cst_28 = arith.constant dense<0.000000e+00> : vector<16x16xf32>
    %36 = tpu.matmul %26, %35, %cst_28 {dimension_numbers = #tpu.dot_dimension_numbers<[1], [0], [0], [1], [0, 0, 1, 1], [], []>} : vector<16x32xbf16>, vector<32x16xbf16>, vector<16x16xf32> -> vector<16x16xf32>
    %37 = vector.broadcast %27 : vector<16x1xf32> to vector<16x16xf32>
    %38 = arith.mulf %36, %37 : vector<16x16xf32>
    %39 = vector.broadcast %30 : vector<1x16xf32> to vector<16x16xf32>
    %40 = arith.addf %38, %39 : vector<16x16xf32>
    %cst_29 = arith.constant 0.000000e+00 : f32
    %41 = vector.broadcast %cst_29 : f32 to vector<16x16xf32>
    %42 = arith.maximumf %40, %41 : vector<16x16xf32>
    %c0_30 = arith.constant 0 : index
    %c0_31 = arith.constant 0 : index
    %43 = vector.load %arg13[%c0_30, %c0_31] : memref<1x16xf32, #tpu.memory_space<vmem>>, vector<1x16xf32>
    %cst_32 = arith.constant dense<0.000000e+00> : vector<32x16xf32>
    %44 = tpu.matmul %19, %42, %cst_32 {dimension_numbers = #tpu.dot_dimension_numbers<[1], [0], [0], [1], [0, 0, 1, 1], [], []>} : vector<32x16xf32>, vector<16x16xf32>, vector<32x16xf32> -> vector<32x16xf32>
    %cst_33 = arith.constant dense<0.000000e+00> : vector<32x256xf32>
    %45 = tpu.matmul %44, %28, %cst_33 {dimension_numbers = #tpu.dot_dimension_numbers<[1], [0], [0], [1], [0, 0, 1, 1], [], []>} : vector<32x16xf32>, vector<16x256xf32>, vector<32x256xf32> -> vector<32x256xf32>
    %46 = arith.mulf %45, %13 : vector<32x256xf32>
    %cst_34 = arith.constant dense<0.000000e+00> : vector<32x16xf32>
    %47 = tpu.matmul %46, %29, %cst_34 {dimension_numbers = #tpu.dot_dimension_numbers<[1], [0], [0], [1], [0, 0, 1, 1], [], []>} : vector<32x256xf32>, vector<256x16xf32>, vector<32x16xf32> -> vector<32x16xf32>
    %48 = arith.truncf %47 : vector<32x16xf32> to vector<32x16xbf16>
    %cst_35 = arith.constant dense<0.000000e+00> : vector<16x16xf32>
    %49 = tpu.matmul %26, %48, %cst_35 {dimension_numbers = #tpu.dot_dimension_numbers<[1], [0], [0], [1], [0, 0, 1, 1], [], []>} : vector<16x32xbf16>, vector<32x16xbf16>, vector<16x16xf32> -> vector<16x16xf32>
    %50 = vector.broadcast %27 : vector<16x1xf32> to vector<16x16xf32>
    %51 = arith.mulf %49, %50 : vector<16x16xf32>
    %52 = vector.broadcast %43 : vector<1x16xf32> to vector<16x16xf32>
    %53 = arith.addf %51, %52 : vector<16x16xf32>
    %cst_36 = arith.constant 0.000000e+00 : f32
    %54 = vector.broadcast %cst_36 : f32 to vector<16x16xf32>
    %55 = arith.maximumf %53, %54 : vector<16x16xf32>
    %c0_37 = arith.constant 0 : index
    %c0_38 = arith.constant 0 : index
    %56 = vector.load %arg3[%c0_37, %c0_38] : memref<24x1xi32, #tpu.memory_space<vmem>>, vector<24x1xi32>
    %57 = tpu.iota {dimensions = array<i32: 1>} : vector<24x16xi32>
    %58 = vector.broadcast %56 : vector<24x1xi32> to vector<24x16xi32>
    %59 = arith.cmpi eq, %58, %57 : vector<24x16xi32>
    %60 = arith.extui %59 : vector<24x16xi1> to vector<24x16xi32>
    %61 = arith.sitofp %60 : vector<24x16xi32> to vector<24x16xf32>
    %c0_39 = arith.constant 0 : index
    %c0_40 = arith.constant 0 : index
    %62 = vector.load %arg4[%c0_39, %c0_40] : memref<24x1xi32, #tpu.memory_space<vmem>>, vector<24x1xi32>
    %63 = tpu.iota {dimensions = array<i32: 1>} : vector<24x16xi32>
    %64 = vector.broadcast %62 : vector<24x1xi32> to vector<24x16xi32>
    %65 = arith.cmpi eq, %64, %63 : vector<24x16xi32>
    %66 = arith.extui %65 : vector<24x16xi1> to vector<24x16xi32>
    %67 = arith.sitofp %66 : vector<24x16xi32> to vector<24x16xf32>
    %cst_41 = arith.constant dense<0.000000e+00> : vector<24x16xf32>
    %68 = tpu.matmul %61, %55, %cst_41 {dimension_numbers = #tpu.dot_dimension_numbers<[1], [0], [0], [1], [0, 0, 1, 1], [], []>} : vector<24x16xf32>, vector<16x16xf32>, vector<24x16xf32> -> vector<24x16xf32>
    %cst_42 = arith.constant dense<0.000000e+00> : vector<24x16xf32>
    %69 = tpu.matmul %67, %55, %cst_42 {dimension_numbers = #tpu.dot_dimension_numbers<[1], [0], [0], [1], [0, 0, 1, 1], [], []>} : vector<24x16xf32>, vector<16x16xf32>, vector<24x16xf32> -> vector<24x16xf32>
    %c0_43 = arith.constant 0 : index
    %c0_44 = arith.constant 0 : index
    %70 = vector.load %arg14[%c0_43, %c0_44] : memref<16x16xf32, #tpu.memory_space<vmem>>, vector<16x16xf32>
    %cst_45 = arith.constant dense<0.000000e+00> : vector<24x16xf32>
    %71 = tpu.matmul %68, %70, %cst_45 {dimension_numbers = #tpu.dot_dimension_numbers<[1], [0], [0], [1], [0, 0, 1, 1], [], []>} : vector<24x16xf32>, vector<16x16xf32>, vector<24x16xf32> -> vector<24x16xf32>
    %c0_46 = arith.constant 0 : index
    %c0_47 = arith.constant 0 : index
    %72 = vector.load %arg15[%c0_46, %c0_47] : memref<16x16xf32, #tpu.memory_space<vmem>>, vector<16x16xf32>
    %cst_48 = arith.constant dense<0.000000e+00> : vector<24x16xf32>
    %73 = tpu.matmul %69, %72, %cst_48 {dimension_numbers = #tpu.dot_dimension_numbers<[1], [0], [0], [1], [0, 0, 1, 1], [], []>} : vector<24x16xf32>, vector<16x16xf32>, vector<24x16xf32> -> vector<24x16xf32>
    %74 = arith.addf %71, %73 : vector<24x16xf32>
    %c0_49 = arith.constant 0 : index
    %c0_50 = arith.constant 0 : index
    %75 = vector.load %arg16[%c0_49, %c0_50] : memref<1x16xf32, #tpu.memory_space<vmem>>, vector<1x16xf32>
    %76 = vector.broadcast %75 : vector<1x16xf32> to vector<24x16xf32>
    %77 = arith.addf %74, %76 : vector<24x16xf32>
    %cst_51 = arith.constant 0.000000e+00 : f32
    %78 = vector.broadcast %cst_51 : f32 to vector<24x16xf32>
    %79 = arith.maximumf %77, %78 : vector<24x16xf32>
    %c0_52 = arith.constant 0 : index
    %c0_53 = arith.constant 0 : index
    %80 = vector.load %arg17[%c0_52, %c0_53] : memref<16x128xf32, #tpu.memory_space<vmem>>, vector<16x128xf32>
    %cst_54 = arith.constant dense<0.000000e+00> : vector<24x128xf32>
    %81 = tpu.matmul %79, %80, %cst_54 {dimension_numbers = #tpu.dot_dimension_numbers<[1], [0], [0], [1], [0, 0, 1, 1], [], []>} : vector<24x16xf32>, vector<16x128xf32>, vector<24x128xf32> -> vector<24x128xf32>
    %c0_55 = arith.constant 0 : index
    %c0_56 = arith.constant 0 : index
    %82 = vector.load %arg18[%c0_55, %c0_56] : memref<1x128xf32, #tpu.memory_space<vmem>>, vector<1x128xf32>
    %83 = vector.broadcast %82 : vector<1x128xf32> to vector<24x128xf32>
    %84 = arith.addf %81, %83 : vector<24x128xf32>
    %c0_57 = arith.constant 0 : index
    %c0_58 = arith.constant 0 : index
    %85 = vector.load %arg21[%c0_57, %c0_58] : memref<24x128xf32, #tpu.memory_space<vmem>>, vector<24x128xf32>
    tpu.vector_store %arg21[%c0_57, %c0_58], %84 {strides = array<i32>} : memref<24x128xf32, #tpu.memory_space<vmem>>, vector<24x128xf32>,
    return
  }
  func.func @transform_0(%arg0: i32) -> (i32, i32) {
    %c0_i32 = arith.constant 0 : i32
    %c0_i32_0 = arith.constant 0 : i32
    %c0_i32_1 = arith.constant 0 : i32
    return %c0_i32, %c0_i32_0 : i32, i32
  }
  func.func @transform_1(%arg0: i32) -> (i32, i32) {
    %c0_i32 = arith.constant 0 : i32
    %c0_i32_0 = arith.constant 0 : i32
    %c0_i32_1 = arith.constant 0 : i32
    return %c0_i32, %c0_i32_0 : i32, i32
  }
  func.func @transform_2(%arg0: i32) -> (i32, i32) {
    %c0_i32 = arith.constant 0 : i32
    %c0_i32_0 = arith.constant 0 : i32
    %c0_i32_1 = arith.constant 0 : i32
    return %c0_i32, %c0_i32_0 : i32, i32
  }
  func.func @transform_3(%arg0: i32) -> (i32, i32) {
    %c0_i32 = arith.constant 0 : i32
    %c0_i32_0 = arith.constant 0 : i32
    %c0_i32_1 = arith.constant 0 : i32
    return %c0_i32, %c0_i32_0 : i32, i32
  }
  func.func @transform_4(%arg0: i32) -> (i32, i32) {
    %c0_i32 = arith.constant 0 : i32
    %c0_i32_0 = arith.constant 0 : i32
    %c0_i32_1 = arith.constant 0 : i32
    return %c0_i32, %c0_i32_0 : i32, i32
  }
  func.func @transform_5(%arg0: i32) -> (i32, i32) {
    %c0_i32 = arith.constant 0 : i32
    %c0_i32_0 = arith.constant 0 : i32
    %c0_i32_1 = arith.constant 0 : i32
    return %c0_i32, %c0_i32_0 : i32, i32
  }
  func.func @transform_6(%arg0: i32) -> (i32, i32) {
    %c0_i32 = arith.constant 0 : i32
    %c0_i32_0 = arith.constant 0 : i32
    %c0_i32_1 = arith.constant 0 : i32
    return %c0_i32, %c0_i32_0 : i32, i32
  }
  func.func @transform_7(%arg0: i32) -> (i32, i32) {
    %c0_i32 = arith.constant 0 : i32
    %c0_i32_0 = arith.constant 0 : i32
    %c0_i32_1 = arith.constant 0 : i32
    return %c0_i32, %c0_i32_0 : i32, i32
  }
  func.func @transform_8(%arg0: i32) -> (i32, i32) {
    %c0_i32 = arith.constant 0 : i32
    %c0_i32_0 = arith.constant 0 : i32
    %c0_i32_1 = arith.constant 0 : i32
    return %c0_i32, %c0_i32_0 : i32, i32
  }
  func.func @transform_9(%arg0: i32) -> (i32, i32) {
    %c0_i32 = arith.constant 0 : i32
    %c0_i32_0 = arith.constant 0 : i32
    %c0_i32_1 = arith.constant 0 : i32
    return %c0_i32, %c0_i32_0 : i32, i32
  }
  func.func @transform_10(%arg0: i32) -> (i32, i32) {
    %c0_i32 = arith.constant 0 : i32
    %c0_i32_0 = arith.constant 0 : i32
    %c0_i32_1 = arith.constant 0 : i32
    return %c0_i32, %c0_i32_0 : i32, i32
  }
  func.func @transform_11(%arg0: i32) -> (i32, i32) {
    %c0_i32 = arith.constant 0 : i32
    %c0_i32_0 = arith.constant 0 : i32
    %c0_i32_1 = arith.constant 0 : i32
    return %c0_i32, %c0_i32_0 : i32, i32
  }
  func.func @transform_12(%arg0: i32) -> (i32, i32) {
    %c0_i32 = arith.constant 0 : i32
    %c0_i32_0 = arith.constant 0 : i32
    %c0_i32_1 = arith.constant 0 : i32
    return %c0_i32, %c0_i32_0 : i32, i32
  }
  func.func @transform_13(%arg0: i32) -> (i32, i32) {
    %c0_i32 = arith.constant 0 : i32
    %c0_i32_0 = arith.constant 0 : i32
    %c0_i32_1 = arith.constant 0 : i32
    return %c0_i32, %c0_i32_0 : i32, i32
  }
  func.func @transform_14(%arg0: i32) -> (i32, i32) {
    %c0_i32 = arith.constant 0 : i32
    %c0_i32_0 = arith.constant 0 : i32
    %c0_i32_1 = arith.constant 0 : i32
    return %c0_i32, %c0_i32_0 : i32, i32
  }
  func.func @transform_15(%arg0: i32) -> (i32, i32) {
    %c0_i32 = arith.constant 0 : i32
    %c0_i32_0 = arith.constant 0 : i32
    %c0_i32_1 = arith.constant 0 : i32
    return %c0_i32, %c0_i32_0 : i32, i32
  }
  func.func @transform_16(%arg0: i32) -> (i32, i32) {
    %c0_i32 = arith.constant 0 : i32
    %c0_i32_0 = arith.constant 0 : i32
    %c0_i32_1 = arith.constant 0 : i32
    return %c0_i32, %c0_i32_0 : i32, i32
  }
  func.func @transform_17(%arg0: i32) -> (i32, i32) {
    %c0_i32 = arith.constant 0 : i32
    %c0_i32_0 = arith.constant 0 : i32
    %c0_i32_1 = arith.constant 0 : i32
    return %c0_i32, %c0_i32_0 : i32, i32
  }
  func.func @transform_18(%arg0: i32) -> (i32, i32) {
    %c0_i32 = arith.constant 0 : i32
    %c0_i32_0 = arith.constant 0 : i32
    %c0_i32_1 = arith.constant 0 : i32
    return %c0_i32, %c0_i32_0 : i32, i32
  }
  func.func @transform_19(%arg0: i32) -> (i32, i32) {
    %c0_i32 = arith.constant 0 : i32
    %c0_i32_0 = arith.constant 0 : i32
    %c0_i32_1 = arith.constant 0 : i32
    return %c0_i32, %c0_i32_0 : i32, i32
  }
  func.func @transform_20(%arg0: i32) -> (i32, i32) {
    %c0_i32 = arith.constant 0 : i32
    %c0_i32_0 = arith.constant 0 : i32
    %c0_i32_1 = arith.constant 0 : i32
    return %c0_i32, %c0_i32_0 : i32, i32
  }
}

</mosaic_0001>

<llo_original>
// kernel: gnn_forward.1
$region0: #{gnn_forward.1}
  #allocation0 [shape = 'u32[]', space=smem, size = 0x4, offset = 0x4, fixed_abs, tag = 'smem constant byte address 0x4 - core index']
  #allocation1 [shape = 'u32[144,128]{1,0:T(1,128)}', space=vmem, size = 0x12000, scoped, tag = 'internal scratch']
  %s0 = inlined_call_operand.vmem [shape: s32[32,1], index: 0, kind: input, shape index: {}]
  %s1 = inlined_call_operand.vmem [shape: s32[1,32], index: 1, kind: input, shape index: {}]
  %s2 = inlined_call_operand.vmem [shape: s32[24,1], index: 2, kind: input, shape index: {}]
  %s3 = inlined_call_operand.vmem [shape: s32[24,1], index: 3, kind: input, shape index: {}]
  %s4 = inlined_call_operand.vmem [shape: f32[16,1], index: 4, kind: input, shape index: {}]
  %s5 = inlined_call_operand.vmem [shape: f32[16,8], index: 5, kind: input, shape index: {}]
  %s6 = inlined_call_operand.vmem [shape: f32[32,4], index: 6, kind: input, shape index: {}]
  %s7 = inlined_call_operand.vmem [shape: f32[8,16], index: 7, kind: input, shape index: {}]
  %s8 = inlined_call_operand.vmem [shape: f32[1,16], index: 8, kind: input, shape index: {}]
  %s9 = inlined_call_operand.vmem [shape: f32[4,256], index: 9, kind: input, shape index: {}]
  %s10 = inlined_call_operand.vmem [shape: f32[1,256], index: 10, kind: input, shape index: {}]
  %s11 = inlined_call_operand.vmem [shape: f32[1,16], index: 11, kind: input, shape index: {}]
  %s12 = inlined_call_operand.vmem [shape: f32[1,16], index: 12, kind: input, shape index: {}]
  %s13 = inlined_call_operand.vmem [shape: f32[16,16], index: 13, kind: input, shape index: {}]
  %s14 = inlined_call_operand.vmem [shape: f32[16,16], index: 14, kind: input, shape index: {}]
  %s15 = inlined_call_operand.vmem [shape: f32[1,16], index: 15, kind: input, shape index: {}]
  %s16 = inlined_call_operand.vmem [shape: f32[16,128], index: 16, kind: input, shape index: {}]
  %s17 = inlined_call_operand.vmem [shape: f32[1,128], index: 17, kind: input, shape index: {}]
  %s18 = inlined_call_operand.vmem [shape: f32[16,256], index: 18, kind: input, shape index: {}]
  %s19 = inlined_call_operand.vmem [shape: f32[256,16], index: 19, kind: input, shape index: {}]
  %s20 = inlined_call_operand.vmem [shape: f32[24,128], index: 20, kind: output, shape index: {}]
  %s21 = sld [smem:[#allocation0]]
  $region90: #{gnn_forward.1} parent=0
    _
  %s23 = ssub.s32 1, %s21
  %s24 = scalar_select 0, %s23, %s21
  // Predicated region
  $region2: #{gnn_forward.1} parent=0 // pred_check
    _
  $region3: #{gnn_forward.1} parent=0 // pred_check_branch
    %26 = sbr.rel (0) target = $region5
  $region4: #{gnn_forward.1} parent=0 // pred_region
    _
  $region5: #{gnn_forward.1} parent=0 // pred_fallthru
    _
  // Predicated region
  $region6: #{gnn_forward.1} parent=0 // pred_check
    _
  $region7: #{gnn_forward.1} parent=0 // pred_check_branch
    %28 = sbr.rel (0) target = $region9
  $region8: #{gnn_forward.1} parent=0 // pred_region
    _
  $region9: #{gnn_forward.1} parent=0 // pred_fallthru
    _
  // Predicated region
  $region10: #{gnn_forward.1} parent=0 // pred_check
    _
  $region11: #{gnn_forward.1} parent=0 // pred_check_branch
    %30 = sbr.rel (0) target = $region13
  $region12: #{gnn_forward.1} parent=0 // pred_region
    _
  $region13: #{gnn_forward.1} parent=0 // pred_fallthru
    _
  // Predicated region
  $region14: #{gnn_forward.1} parent=0 // pred_check
    _
  $region15: #{gnn_forward.1} parent=0 // pred_check_branch
    %32 = sbr.rel (0) target = $region17
  $region16: #{gnn_forward.1} parent=0 // pred_region
    _
  $region17: #{gnn_forward.1} parent=0 // pred_fallthru
    _
  // Predicated region
  $region18: #{gnn_forward.1} parent=0 // pred_check
    _
  $region19: #{gnn_forward.1} parent=0 // pred_check_branch
    %34 = sbr.rel (0) target = $region21
  $region20: #{gnn_forward.1} parent=0 // pred_region
    _
  $region21: #{gnn_forward.1} parent=0 // pred_fallthru
    _
  // Predicated region
  $region22: #{gnn_forward.1} parent=0 // pred_check
    _
  $region23: #{gnn_forward.1} parent=0 // pred_check_branch
    %36 = sbr.rel (0) target = $region25
  $region24: #{gnn_forward.1} parent=0 // pred_region
    _
  $region25: #{gnn_forward.1} parent=0 // pred_fallthru
    _
  // Predicated region
  $region26: #{gnn_forward.1} parent=0 // pred_check
    _
  $region27: #{gnn_forward.1} parent=0 // pred_check_branch
    %38 = sbr.rel (0) target = $region29
  $region28: #{gnn_forward.1} parent=0 // pred_region
    _
  $region29: #{gnn_forward.1} parent=0 // pred_fallthru
    _
  // Predicated region
  $region30: #{gnn_forward.1} parent=0 // pred_check
    _
  $region31: #{gnn_forward.1} parent=0 // pred_check_branch
    %40 = sbr.rel (0) target = $region33
  $region32: #{gnn_forward.1} parent=0 // pred_region
    _
  $region33: #{gnn_forward.1} parent=0 // pred_fallthru
    _
  // Predicated region
  $region34: #{gnn_forward.1} parent=0 // pred_check
    _
  $region35: #{gnn_forward.1} parent=0 // pred_check_branch
    %42 = sbr.rel (0) target = $region37
  $region36: #{gnn_forward.1} parent=0 // pred_region
    _
  $region37: #{gnn_forward.1} parent=0 // pred_fallthru
    _
  // Predicated region
  $region38: #{gnn_forward.1} parent=0 // pred_check
    _
  $region39: #{gnn_forward.1} parent=0 // pred_check_branch
    %44 = sbr.rel (0) target = $region41
  $region40: #{gnn_forward.1} parent=0 // pred_region
    _
  $region41: #{gnn_forward.1} parent=0 // pred_fallthru
    _
  // Predicated region
  $region42: #{gnn_forward.1} parent=0 // pred_check
    _
  $region43: #{gnn_forward.1} parent=0 // pred_check_branch
    %46 = sbr.rel (0) target = $region45
  $region44: #{gnn_forward.1} parent=0 // pred_region
    _
  $region45: #{gnn_forward.1} parent=0 // pred_fallthru
    _
  // Predicated region
  $region46: #{gnn_forward.1} parent=0 // pred_check
    _
  $region47: #{gnn_forward.1} parent=0 // pred_check_branch
    %48 = sbr.rel (0) target = $region49
  $region48: #{gnn_forward.1} parent=0 // pred_region
    _
  $region49: #{gnn_forward.1} parent=0 // pred_fallthru
    _
  // Predicated region
  $region50: #{gnn_forward.1} parent=0 // pred_check
    _
  $region51: #{gnn_forward.1} parent=0 // pred_check_branch
    %50 = sbr.rel (0) target = $region53
  $region52: #{gnn_forward.1} parent=0 // pred_region
    _
  $region53: #{gnn_forward.1} parent=0 // pred_fallthru
    _
  // Predicated region
  $region54: #{gnn_forward.1} parent=0 // pred_check
    _
  $region55: #{gnn_forward.1} parent=0 // pred_check_branch
    %52 = sbr.rel (0) target = $region57
  $region56: #{gnn_forward.1} parent=0 // pred_region
    _
  $region57: #{gnn_forward.1} parent=0 // pred_fallthru
    _
  // Predicated region
  $region58: #{gnn_forward.1} parent=0 // pred_check
    _
  $region59: #{gnn_forward.1} parent=0 // pred_check_branch
    %54 = sbr.rel (0) target = $region61
  $region60: #{gnn_forward.1} parent=0 // pred_region
    _
  $region61: #{gnn_forward.1} parent=0 // pred_fallthru
    _
  // Predicated region
  $region62: #{gnn_forward.1} parent=0 // pred_check
    _
  $region63: #{gnn_forward.1} parent=0 // pred_check_branch
    %56 = sbr.rel (0) target = $region65
  $region64: #{gnn_forward.1} parent=0 // pred_region
    _
  $region65: #{gnn_forward.1} parent=0 // pred_fallthru
    _
  // Predicated region
  $region66: #{gnn_forward.1} parent=0 // pred_check
    _
  $region67: #{gnn_forward.1} parent=0 // pred_check_branch
    %58 = sbr.rel (0) target = $region69
  $region68: #{gnn_forward.1} parent=0 // pred_region
    _
  $region69: #{gnn_forward.1} parent=0 // pred_fallthru
    _
  // Predicated region
  $region70: #{gnn_forward.1} parent=0 // pred_check
    _
  $region71: #{gnn_forward.1} parent=0 // pred_check_branch
    %60 = sbr.rel (0) target = $region73
  $region72: #{gnn_forward.1} parent=0 // pred_region
    _
  $region73: #{gnn_forward.1} parent=0 // pred_fallthru
    _
  // Predicated region
  $region74: #{gnn_forward.1} parent=0 // pred_check
    _
  $region75: #{gnn_forward.1} parent=0 // pred_check_branch
    %62 = sbr.rel (0) target = $region77
  $region76: #{gnn_forward.1} parent=0 // pred_region
    _
  $region77: #{gnn_forward.1} parent=0 // pred_fallthru
    _
  // Predicated region
  $region78: #{gnn_forward.1} parent=0 // pred_check
    _
  $region79: #{gnn_forward.1} parent=0 // pred_check_branch
    %64 = sbr.rel (0) target = $region81
  $region80: #{gnn_forward.1} parent=0 // pred_region
    _
  $region81: #{gnn_forward.1} parent=0 // pred_fallthru
    _
  %v66 = vld [vmem:[%s5] sm:$0xff]
  %v67 = vld [vmem:[%s5 + $0x8] sm:$0xff]
  %v68 = vld [vmem:[%s7] sm:$0xff]
  %v69 = vld [vmem:[%s8] sm:$0x1]
  %v71 = vlaneseq
  %v72 = vshrl.u32 %v71, 7
  %v73 = vsub.s32 0, %v72
  %v74 = vrot.slane %v69, %v73
  %vm76 = vcmask 64512
  %v78 = vsel %vm76, %v66, 0
  %v81 = vsel %vm76, %v67, 0
  %83 = vmatprep.subr.mxu0 0.0
  %84 = vmatpush1.msra.mxu0 0.0
  %85 = vmatprep.subr.mxu0 0.0
  %86 = vmatpush1.msra.mxu0 0.0
  %87 = vmatprep.subr.mxu0 0.0
  %88 = vmatpush1.msra.mxu0 0.0
  %89 = vmatprep.subr.mxu0 0.0
  %90 = vmatpush1.msra.mxu0 0.0
  %91 = vmatprep.subr.mxu0 0.0
  %92 = vmatpush1.msra.mxu0 0.0
  %93 = vmatprep.subr.mxu0 0.0
  %94 = vmatpush1.msra.mxu0 0.0
  %95 = vmatprep.subr.mxu0 0.0
  %96 = vmatpush1.msra.mxu0 0.0
  %97 = vmatprep.subr.mxu0 0.0
  %98 = vmatpush1.msra.mxu0 0.0
  %99 = vmatprep.subr.mxu0 0.0
  %100 = vmatpush1.msra.mxu0 0.0
  %101 = vmatprep.subr.mxu0 0.0
  %102 = vmatpush1.msra.mxu0 0.0
  %103 = vmatprep.subr.mxu0 0.0
  %104 = vmatpush1.msra.mxu0 0.0
  %105 = vmatprep.subr.mxu0 0.0
  %106 = vmatpush1.msra.mxu0 0.0
  %107 = vmatprep.subr.mxu0 0.0
  %108 = vmatpush1.msra.mxu0 0.0
  %109 = vmatprep.subr.mxu0 0.0
  %110 = vmatpush1.msra.mxu0 0.0
  %111 = vmatprep.subr.mxu0 0.0
  %112 = vmatpush1.msra.mxu0 0.0
  %113 = vmatprep.subr.mxu0 0.0
  %114 = vmatpush1.msra.mxu0 %v68
  %115 = vmatprep.subr.mxu0 0.0
  %116 = vmatpush2.msra.mxu0 0.0
  %117 = vmatprep.subr.mxu0 0.0
  %118 = vmatpush2.msra.mxu0 0.0
  %119 = vmatprep.subr.mxu0 0.0
  %120 = vmatpush2.msra.mxu0 0.0
  %121 = vmatprep.subr.mxu0 0.0
  %122 = vmatpush2.msra.mxu0 0.0
  %123 = vmatprep.subr.mxu0 0.0
  %124 = vmatpush2.msra.mxu0 0.0
  %125 = vmatprep.subr.mxu0 0.0
  %126 = vmatpush2.msra.mxu0 0.0
  %127 = vmatprep.subr.mxu0 0.0
  %128 = vmatpush2.msra.mxu0 0.0
  %129 = vmatprep.subr.mxu0 0.0
  %130 = vmatpush2.msra.mxu0 0.0
  %131 = vmatprep.subr.mxu0 0.0
  %132 = vmatpush2.msra.mxu0 0.0
  %133 = vmatprep.subr.mxu0 0.0
  %134 = vmatpush2.msra.mxu0 0.0
  %135 = vmatprep.subr.mxu0 0.0
  %136 = vmatpush2.msra.mxu0 0.0
  %137 = vmatprep.subr.mxu0 0.0
  %138 = vmatpush2.msra.mxu0 0.0
  %139 = vmatprep.subr.mxu0 0.0
  %140 = vmatpush2.msra.mxu0 0.0
  %141 = vmatprep.subr.mxu0 0.0
  %142 = vmatpush2.msra.mxu0 0.0
  %143 = vmatprep.subr.mxu0 0.0
  %144 = vmatpush2.msra.mxu0 0.0
  %145 = vmatprep.subr.mxu0 0.0
  %146 = vmatpush2.msra.mxu0 0.0
  %147 = vmatprep.mubr.f32.mxu0 0.0
  %148 = vmatmul.mubr.f32.gmra.mxu0 %v78
  %v149 = vpop.f32.mrf.mxu0
  %v150 = vadd.f32 %v74, %v149
  %v151 = vpop.f32.mrf.mxu0
  %152 = vmatprep.mubr.f32.mxu0 0.0
  %153 = vmatmul.mubr.f32.gmra.mxu0 %v81
  %v154 = vpop.f32.mrf.mxu0
  %v155 = vadd.f32 %v74, %v154
  %v156 = vpop.f32.mrf.mxu0
  %157 = vdwg.mxu0
  %v158 = vld [vmem:[%s6] sm:$0xff]
  %v159 = vld [vmem:[%s6 + $0x8] sm:$0xff]
  %v160 = vld [vmem:[%s6 + $0x10] sm:$0xff]
  %v161 = vld [vmem:[%s6 + $0x18] sm:$0xff]
  %v162 = vld [vmem:[%s9] sm:$0xff]
  %v163 = vld [vmem:[%s10] sm:$0x3]
  %v165 = vlaneseq
  %v166 = vshrl.u32 %v165, 7
  %v167 = vsub.s32 0, %v166
  %v168 = vrot.slane %v163, %v167
  %v169 = vlaneseq
  %v170 = vshrl.u32 %v169, 7
  %v171 = vsub.s32 1, %v170
  %v172 = vrot.slane %v163, %v171
  %v176 = vcombine.high %v162, %v162
  %vm177 = vcmask 31744
  %v179 = vsel %vm177, %v158, 0
  %v182 = vsel %vm177, %v159, 0
  %v185 = vsel %vm177, %v160, 0
  %v188 = vsel %vm177, %v161, 0
  %vm190 = vcmask 1043456
  %v191 = vsel %vm190, %v162, 0
  %v193 = vsel %vm190, %v176, 0
  %195 = vmatprep.subr.mxu0 0.0
  %196 = vmatpush1.msra.mxu0 0.0
  %197 = vmatprep.subr.mxu0 0.0
  %198 = vmatpush1.msra.mxu0 0.0
  %199 = vmatprep.subr.mxu0 0.0
  %200 = vmatpush1.msra.mxu0 0.0
  %201 = vmatprep.subr.mxu0 0.0
  %202 = vmatpush1.msra.mxu0 0.0
  %203 = vmatprep.subr.mxu0 0.0
  %204 = vmatpush1.msra.mxu0 0.0
  %205 = vmatprep.subr.mxu0 0.0
  %206 = vmatpush1.msra.mxu0 0.0
  %207 = vmatprep.subr.mxu0 0.0
  %208 = vmatpush1.msra.mxu0 0.0
  %209 = vmatprep.subr.mxu0 0.0
  %210 = vmatpush1.msra.mxu0 0.0
  %211 = vmatprep.subr.mxu0 0.0
  %212 = vmatpush1.msra.mxu0 0.0
  %213 = vmatprep.subr.mxu0 0.0
  %214 = vmatpush1.msra.mxu0 0.0
  %215 = vmatprep.subr.mxu0 0.0
  %216 = vmatpush1.msra.mxu0 0.0
  %217 = vmatprep.subr.mxu0 0.0
  %218 = vmatpush1.msra.mxu0 0.0
  %219 = vmatprep.subr.mxu0 0.0
  %220 = vmatpush1.msra.mxu0 0.0
  %221 = vmatprep.subr.mxu0 0.0
  %222 = vmatpush1.msra.mxu0 0.0
  %223 = vmatprep.subr.mxu0 0.0
  %224 = vmatpush1.msra.mxu0 0.0
  %225 = vmatprep.subr.mxu0 %v193
  %226 = vmatpush1.msra.mxu0 %v191
  %227 = vmatprep.subr.mxu0 0.0
  %228 = vmatpush2.msra.mxu0 0.0
  %229 = vmatprep.subr.mxu0 0.0
  %230 = vmatpush2.msra.mxu0 0.0
  %231 = vmatprep.subr.mxu0 0.0
  %232 = vmatpush2.msra.mxu0 0.0
  %233 = vmatprep.subr.mxu0 0.0
  %234 = vmatpush2.msra.mxu0 0.0
  %235 = vmatprep.subr.mxu0 0.0
  %236 = vmatpush2.msra.mxu0 0.0
  %237 = vmatprep.subr.mxu0 0.0
  %238 = vmatpush2.msra.mxu0 0.0
  %239 = vmatprep.subr.mxu0 0.0
  %240 = vmatpush2.msra.mxu0 0.0
  %241 = vmatprep.subr.mxu0 0.0
  %242 = vmatpush2.msra.mxu0 0.0
  %243 = vmatprep.subr.mxu0 0.0
  %244 = vmatpush2.msra.mxu0 0.0
  %245 = vmatprep.subr.mxu0 0.0
  %246 = vmatpush2.msra.mxu0 0.0
  %247 = vmatprep.subr.mxu0 0.0
  %248 = vmatpush2.msra.mxu0 0.0
  %249 = vmatprep.subr.mxu0 0.0
  %250 = vmatpush2.msra.mxu0 0.0
  %251 = vmatprep.subr.mxu0 0.0
  %252 = vmatpush2.msra.mxu0 0.0
  %253 = vmatprep.subr.mxu0 0.0
  %254 = vmatpush2.msra.mxu0 0.0
  %255 = vmatprep.subr.mxu0 0.0
  %256 = vmatpush2.msra.mxu0 0.0
  %257 = vmatprep.subr.mxu0 0.0
  %258 = vmatpush2.msra.mxu0 0.0
  %259 = vmatprep.mubr.f32.mxu0 0.0
  %260 = vmatmul.mubr.f32.gmra.mxu0 %v179
  %v261 = vpop.f32.mrf.mxu0
  %v262 = vadd.f32 %v168, %v261
  %v263 = vpop.f32.mrf.mxu0
  %v264 = vadd.f32 %v172, %v263
  %265 = vmatprep.mubr.f32.mxu0 0.0
  %266 = vmatmul.mubr.f32.gmra.mxu0 %v182
  %v267 = vpop.f32.mrf.mxu0
  %v268 = vadd.f32 %v168, %v267
  %v269 = vpop.f32.mrf.mxu0
  %v270 = vadd.f32 %v172, %v269
  %271 = vmatprep.mubr.f32.mxu0 0.0
  %272 = vmatmul.mubr.f32.gmra.mxu0 %v185
  %v273 = vpop.f32.mrf.mxu0
  %v274 = vadd.f32 %v168, %v273
  %v275 = vpop.f32.mrf.mxu0
  %v276 = vadd.f32 %v172, %v275
  %277 = vmatprep.mubr.f32.mxu0 0.0
  %278 = vmatmul.mubr.f32.gmra.mxu0 %v188
  %v279 = vpop.f32.mrf.mxu0
  %v280 = vadd.f32 %v168, %v279
  %v281 = vpop.f32.mrf.mxu0
  %v282 = vadd.f32 %v172, %v281
  %283 = vdwg.mxu0
  %v284 = vmax.f32 %v262, 0.0
  %v285 = vmax.f32 %v264, 0.0
  %v286 = vmax.f32 %v268, 0.0
  %v287 = vmax.f32 %v270, 0.0
  %v288 = vmax.f32 %v274, 0.0
  %v289 = vmax.f32 %v276, 0.0
  %v290 = vmax.f32 %v280, 0.0
  %v291 = vmax.f32 %v282, 0.0
  %v292 = vld [vmem:[%s0] sm:$0xff]
  %v293 = vld [vmem:[%s0 + $0x8] sm:$0xff]
  %v294 = vld [vmem:[%s0 + $0x10] sm:$0xff]
  %v295 = vld [vmem:[%s0 + $0x18] sm:$0xff]
  %v296 = vlaneseq
  %v297 = vand.u32 %v296, 127
  %298 = vset.pattern.permute.xlu0 0
  %299 = vperm.xlu0 %298, %v292
  %v300 = vpop.permute.xlu0 %299
  %301 = vset.pattern.permute.xlu0 0
  %302 = vperm.xlu0 %301, %v293
  %v303 = vpop.permute.xlu0 %302
  %304 = vset.pattern.permute.xlu0 0
  %305 = vperm.xlu0 %304, %v294
  %v306 = vpop.permute.xlu0 %305
  %307 = vset.pattern.permute.xlu0 0
  %308 = vperm.xlu0 %307, %v295
  %v309 = vpop.permute.xlu0 %308
  %vm310 = vcmp.eq.s32.totalorder %v300, %v297
  %vm311 = vcmp.eq.s32.totalorder %v303, %v297
  %vm312 = vcmp.eq.s32.totalorder %v306, %v297
  %vm313 = vcmp.eq.s32.totalorder %v309, %v297
  %v314 = vsel %vm310, 1, 0
  %v315 = vsel %vm311, 1, 0
  %v316 = vsel %vm312, 1, 0
  %v317 = vsel %vm313, 1, 0
  %v318 = vcvt.s32.f32 %v314
  %v319 = vcvt.s32.f32 %v315
  %v320 = vcvt.s32.f32 %v316
  %v321 = vcvt.s32.f32 %v317
  %v322 = vld [vmem:[%s1] sm:$0x1]
  %v323 = vlaneseq
  %v324 = vshrl.u32 %v323, 7
  %v325 = vadd.s32 %v324, 8
  %v326 = vlaneseq
  %v327 = vshrl.u32 %v326, 7
  %v328 = vsub.s32 0, %v327
  %v329 = vrot.slane %v322, %v328
  %vm330 = vcmp.eq.s32.totalorder %v329, %v324
  %vm331 = vcmp.eq.s32.totalorder %v329, %v325
  %v332 = vsel %vm330, 1, 0
  %v333 = vsel %vm331, 1, 0
  %v334 = vcvt.s32.f32 %v332
  %v335 = vcvt.s32.f32 %v333
  %v336 = vpack.c.bf16 %v335, %v334
  %v337 = vld [vmem:[%s4] sm:$0xff]
  %v338 = vld [vmem:[%s4 + $0x8] sm:$0xff]
  %v339 = vld [vmem:[%s18] sm:$0xff]
  %v340 = vld [vmem:[%s18 + $0x8] sm:$0xff]
  %v341 = vld [vmem:[%s18 + $0x10] sm:$0xff]
  %v342 = vld [vmem:[%s18 + $0x18] sm:$0xff]
  %v343 = vld [vmem:[%s19] sm:$0xff]
  %v344 = vld [vmem:[%s19 + $0x8] sm:$0xff]
  %v345 = vld [vmem:[%s19 + $0x10] sm:$0xff]
  %v346 = vld [vmem:[%s19 + $0x18] sm:$0xff]
  %v347 = vld [vmem:[%s19 + $0x20] sm:$0xff]
  %v348 = vld [vmem:[%s19 + $0x28] sm:$0xff]
  %v349 = vld [vmem:[%s19 + $0x30] sm:$0xff]
  %v350 = vld [vmem:[%s19 + $0x38] sm:$0xff]
  %v351 = vld [vmem:[%s19 + $0x40] sm:$0xff]
  %v352 = vld [vmem:[%s19 + $0x48] sm:$0xff]
  %v353 = vld [vmem:[%s19 + $0x50] sm:$0xff]
  %v354 = vld [vmem:[%s19 + $0x58] sm:$0xff]
  %v355 = vld [vmem:[%s19 + $0x60] sm:$0xff]
  %v356 = vld [vmem:[%s19 + $0x68] sm:$0xff]
  %v357 = vld [vmem:[%s19 + $0x70] sm:$0xff]
  %v358 = vld [vmem:[%s19 + $0x78] sm:$0xff]
  %v359 = vld [vmem:[%s19 + $0x80] sm:$0xff]
  %v360 = vld [vmem:[%s19 + $0x88] sm:$0xff]
  %v361 = vld [vmem:[%s19 + $0x90] sm:$0xff]
  %v362 = vld [vmem:[%s19 + $0x98] sm:$0xff]
  %v363 = vld [vmem:[%s19 + $0xa0] sm:$0xff]
  %v364 = vld [vmem:[%s19 + $0xa8] sm:$0xff]
  %v365 = vld [vmem:[%s19 + $0xb0] sm:$0xff]
  %v366 = vld [vmem:[%s19 + $0xb8] sm:$0xff]
  %v367 = vld [vmem:[%s19 + $0xc0] sm:$0xff]
  %v368 = vld [vmem:[%s19 + $0xc8] sm:$0xff]
  %v369 = vld [vmem:[%s19 + $0xd0] sm:$0xff]
  %v370 = vld [vmem:[%s19 + $0xd8] sm:$0xff]
  %v371 = vld [vmem:[%s19 + $0xe0] sm:$0xff]
  %v372 = vld [vmem:[%s19 + $0xe8] sm:$0xff]
  %v373 = vld [vmem:[%s19 + $0xf0] sm:$0xff]
  %v374 = vld [vmem:[%s19 + $0xf8] sm:$0xff]
  %v375 = vld [vmem:[%s11] sm:$0x1]
  %vm376 = vcmask 130048
  %v378 = vsel %vm376, %v318, 0
  %v381 = vsel %vm376, %v319, 0
  %v384 = vsel %vm376, %v320, 0
  %v387 = vsel %vm376, %v321, 0
  %389 = vmatprep.subr.mxu0 0.0
  %390 = vmatpush1.msra.mxu0 0.0
  %391 = vmatprep.subr.mxu0 0.0
  %392 = vmatpush1.msra.mxu0 0.0
  %393 = vmatprep.subr.mxu0 0.0
  %394 = vmatpush1.msra.mxu0 0.0
  %395 = vmatprep.subr.mxu0 0.0
  %396 = vmatpush1.msra.mxu0 0.0
  %397 = vmatprep.subr.mxu0 0.0
  %398 = vmatpush1.msra.mxu0 0.0
  %399 = vmatprep.subr.mxu0 0.0
  %400 = vmatpush1.msra.mxu0 0.0
  %401 = vmatprep.subr.mxu0 0.0
  %402 = vmatpush1.msra.mxu0 0.0
  %403 = vmatprep.subr.mxu0 0.0
  %404 = vmatpush1.msra.mxu0 0.0
  %405 = vmatprep.subr.mxu0 0.0
  %406 = vmatpush1.msra.mxu0 0.0
  %407 = vmatprep.subr.mxu0 0.0
  %408 = vmatpush1.msra.mxu0 0.0
  %409 = vmatprep.subr.mxu0 0.0
  %410 = vmatpush1.msra.mxu0 0.0
  %411 = vmatprep.subr.mxu0 0.0
  %412 = vmatpush1.msra.mxu0 0.0
  %413 = vmatprep.subr.mxu0 0.0
  %414 = vmatpush1.msra.mxu0 0.0
  %415 = vmatprep.subr.mxu0 0.0
  %416 = vmatpush1.msra.mxu0 0.0
  %417 = vmatprep.subr.mxu0 0.0
  %418 = vmatpush1.msra.mxu0 %v155
  %419 = vmatprep.subr.mxu0 0.0
  %420 = vmatpush1.msra.mxu0 %v150
  %421 = vmatprep.subr.mxu0 0.0
  %422 = vmatpush2.msra.mxu0 0.0
  %423 = vmatprep.subr.mxu0 0.0
  %424 = vmatpush2.msra.mxu0 0.0
  %425 = vmatprep.subr.mxu0 0.0
  %426 = vmatpush2.msra.mxu0 0.0
  %427 = vmatprep.subr.mxu0 0.0
  %428 = vmatpush2.msra.mxu0 0.0
  %429 = vmatprep.subr.mxu0 0.0
  %430 = vmatpush2.msra.mxu0 0.0
  %431 = vmatprep.subr.mxu0 0.0
  %432 = vmatpush2.msra.mxu0 0.0
  %433 = vmatprep.subr.mxu0 0.0
  %434 = vmatpush2.msra.mxu0 0.0
  %435 = vmatprep.subr.mxu0 0.0
  %436 = vmatpush2.msra.mxu0 0.0
  %437 = vmatprep.subr.mxu0 0.0
  %438 = vmatpush2.msra.mxu0 0.0
  %439 = vmatprep.subr.mxu0 0.0
  %440 = vmatpush2.msra.mxu0 0.0
  %441 = vmatprep.subr.mxu0 0.0
  %442 = vmatpush2.msra.mxu0 0.0
  %443 = vmatprep.subr.mxu0 0.0
  %444 = vmatpush2.msra.mxu0 0.0
  %445 = vmatprep.subr.mxu0 0.0
  %446 = vmatpush2.msra.mxu0 0.0
  %447 = vmatprep.subr.mxu0 0.0
  %448 = vmatpush2.msra.mxu0 0.0
  %449 = vmatprep.subr.mxu0 0.0
  %450 = vmatpush2.msra.mxu0 0.0
  %451 = vmatprep.subr.mxu0 0.0
  %452 = vmatpush2.msra.mxu0 0.0
  %453 = vmatprep.mubr.f32.mxu0 0.0
  %454 = vmatmul.mubr.f32.gmra.mxu0 %v378
  %v455 = vpop.f32.mrf.mxu0
  %v456 = vadd.f32 0.0, %v455
  %v457 = vpop.f32.mrf.mxu0
  %458 = vmatprep.mubr.f32.mxu0 0.0
  %459 = vmatmul.mubr.f32.gmra.mxu0 %v381
  %v460 = vpop.f32.mrf.mxu0
  %v461 = vadd.f32 0.0, %v460
  %v462 = vpop.f32.mrf.mxu0
  %463 = vmatprep.mubr.f32.mxu0 0.0
  %464 = vmatmul.mubr.f32.gmra.mxu0 %v384
  %v465 = vpop.f32.mrf.mxu0
  %v466 = vadd.f32 0.0, %v465
  %v467 = vpop.f32.mrf.mxu0
  %468 = vmatprep.mubr.f32.mxu0 0.0
  %469 = vmatmul.mubr.f32.gmra.mxu0 %v387
  %v470 = vpop.f32.mrf.mxu0
  %v471 = vadd.f32 0.0, %v470
  %v472 = vpop.f32.mrf.mxu0
  %473 = vdwg.mxu0
  %v475 = vsel %vm376, %v456, 0
  %v478 = vsel %vm376, %v461, 0
  %v481 = vsel %vm376, %v466, 0
  %v484 = vsel %vm376, %v471, 0
  %486 = vmatprep.subr.mxu0 0.0
  %487 = vmatpush1.msra.mxu0 0.0
  %488 = vmatprep.subr.mxu0 0.0
  %489 = vmatpush1.msra.mxu0 0.0
  %490 = vmatprep.subr.mxu0 0.0
  %491 = vmatpush1.msra.mxu0 0.0
  %492 = vmatprep.subr.mxu0 0.0
  %493 = vmatpush1.msra.mxu0 0.0
  %494 = vmatprep.subr.mxu0 0.0
  %495 = vmatpush1.msra.mxu0 0.0
  %496 = vmatprep.subr.mxu0 0.0
  %497 = vmatpush1.msra.mxu0 0.0
  %498 = vmatprep.subr.mxu0 0.0
  %499 = vmatpush1.msra.mxu0 0.0
  %500 = vmatprep.subr.mxu0 0.0
  %501 = vmatpush1.msra.mxu0 0.0
  %502 = vmatprep.subr.mxu0 0.0
  %503 = vmatpush1.msra.mxu0 0.0
  %504 = vmatprep.subr.mxu0 0.0
  %505 = vmatpush1.msra.mxu0 0.0
  %506 = vmatprep.subr.mxu0 0.0
  %507 = vmatpush1.msra.mxu0 0.0
  %508 = vmatprep.subr.mxu0 0.0
  %509 = vmatpush1.msra.mxu0 0.0
  %510 = vmatprep.subr.mxu0 0.0
  %511 = vmatpush1.msra.mxu0 0.0
  %512 = vmatprep.subr.mxu0 0.0
  %513 = vmatpush1.msra.mxu0 0.0
  %514 = vmatprep.subr.mxu0 %v342
  %515 = vmatpush1.msra.mxu0 %v341
  %516 = vmatprep.subr.mxu0 %v340
  %517 = vmatpush1.msra.mxu0 %v339
  %518 = vmatprep.subr.mxu0 0.0
  %519 = vmatpush2.msra.mxu0 0.0
  %520 = vmatprep.subr.mxu0 0.0
  %521 = vmatpush2.msra.mxu0 0.0
  %522 = vmatprep.subr.mxu0 0.0
  %523 = vmatpush2.msra.mxu0 0.0
  %524 = vmatprep.subr.mxu0 0.0
  %525 = vmatpush2.msra.mxu0 0.0
  %526 = vmatprep.subr.mxu0 0.0
  %527 = vmatpush2.msra.mxu0 0.0
  %528 = vmatprep.subr.mxu0 0.0
  %529 = vmatpush2.msra.mxu0 0.0
  %530 = vmatprep.subr.mxu0 0.0
  %531 = vmatpush2.msra.mxu0 0.0
  %532 = vmatprep.subr.mxu0 0.0
  %533 = vmatpush2.msra.mxu0 0.0
  %534 = vmatprep.subr.mxu0 0.0
  %535 = vmatpush2.msra.mxu0 0.0
  %536 = vmatprep.subr.mxu0 0.0
  %537 = vmatpush2.msra.mxu0 0.0
  %538 = vmatprep.subr.mxu0 0.0
  %539 = vmatpush2.msra.mxu0 0.0
  %540 = vmatprep.subr.mxu0 0.0
  %541 = vmatpush2.msra.mxu0 0.0
  %542 = vmatprep.subr.mxu0 0.0
  %543 = vmatpush2.msra.mxu0 0.0
  %544 = vmatprep.subr.mxu0 0.0
  %545 = vmatpush2.msra.mxu0 0.0
  %546 = vmatprep.subr.mxu0 0.0
  %547 = vmatpush2.msra.mxu0 0.0
  %548 = vmatprep.subr.mxu0 0.0
  %549 = vmatpush2.msra.mxu0 0.0
  %550 = vmatprep.mubr.f32.mxu0 0.0
  %551 = vmatmul.mubr.f32.gmra.mxu0 %v475
  %v552 = vpop.f32.mrf.mxu0
  %v553 = vadd.f32 0.0, %v552
  %v554 = vpop.f32.mrf.mxu0
  %v555 = vadd.f32 0.0, %v554
  %556 = vmatprep.mubr.f32.mxu0 0.0
  %557 = vmatmul.mubr.f32.gmra.mxu0 %v478
  %v558 = vpop.f32.mrf.mxu0
  %v559 = vadd.f32 0.0, %v558
  %v560 = vpop.f32.mrf.mxu0
  %v561 = vadd.f32 0.0, %v560
  %562 = vmatprep.mubr.f32.mxu0 0.0
  %563 = vmatmul.mubr.f32.gmra.mxu0 %v481
  %v564 = vpop.f32.mrf.mxu0
  %v565 = vadd.f32 0.0, %v564
  %v566 = vpop.f32.mrf.mxu0
  %v567 = vadd.f32 0.0, %v566
  %568 = vmatprep.mubr.f32.mxu0 0.0
  %569 = vmatmul.mubr.f32.gmra.mxu0 %v484
  %v570 = vpop.f32.mrf.mxu0
  %v571 = vadd.f32 0.0, %v570
  %v572 = vpop.f32.mrf.mxu0
  %v573 = vadd.f32 0.0, %v572
  %574 = vdwg.mxu0
  %v575 = vmul.f32 %v553, %v284
  %v576 = vmul.f32 %v555, %v285
  %v577 = vmul.f32 %v559, %v286
  %v578 = vmul.f32 %v561, %v287
  %v579 = vmul.f32 %v565, %v288
  %v580 = vmul.f32 %v567, %v289
  %v581 = vmul.f32 %v571, %v290
  %v582 = vmul.f32 %v573, %v291
  %583 = vmatprep.subr.mxu0 0.0
  %584 = vmatpush1.msra.mxu0 %v358
  %585 = vmatprep.subr.mxu0 0.0
  %586 = vmatpush1.msra.mxu0 %v357
  %587 = vmatprep.subr.mxu0 0.0
  %588 = vmatpush1.msra.mxu0 %v356
  %589 = vmatprep.subr.mxu0 0.0
  %590 = vmatpush1.msra.mxu0 %v355
  %591 = vmatprep.subr.mxu0 0.0
  %592 = vmatpush1.msra.mxu0 %v354
  %593 = vmatprep.subr.mxu0 0.0
  %594 = vmatpush1.msra.mxu0 %v353
  %595 = vmatprep.subr.mxu0 0.0
  %596 = vmatpush1.msra.mxu0 %v352
  %597 = vmatprep.subr.mxu0 0.0
  %598 = vmatpush1.msra.mxu0 %v351
  %599 = vmatprep.subr.mxu0 0.0
  %600 = vmatpush1.msra.mxu0 %v350
  %601 = vmatprep.subr.mxu0 0.0
  %602 = vmatpush1.msra.mxu0 %v349
  %603 = vmatprep.subr.mxu0 0.0
  %604 = vmatpush1.msra.mxu0 %v348
  %605 = vmatprep.subr.mxu0 0.0
  %606 = vmatpush1.msra.mxu0 %v347
  %607 = vmatprep.subr.mxu0 0.0
  %608 = vmatpush1.msra.mxu0 %v346
  %609 = vmatprep.subr.mxu0 0.0
  %610 = vmatpush1.msra.mxu0 %v345
  %611 = vmatprep.subr.mxu0 0.0
  %612 = vmatpush1.msra.mxu0 %v344
  %613 = vmatprep.subr.mxu0 0.0
  %614 = vmatpush1.msra.mxu0 %v343
  %615 = vmatprep.subr.mxu0 0.0
  %616 = vmatpush2.msra.mxu0 %v374
  %617 = vmatprep.subr.mxu0 0.0
  %618 = vmatpush2.msra.mxu0 %v373
  %619 = vmatprep.subr.mxu0 0.0
  %620 = vmatpush2.msra.mxu0 %v372
  %621 = vmatprep.subr.mxu0 0.0
  %622 = vmatpush2.msra.mxu0 %v371
  %623 = vmatprep.subr.mxu0 0.0
  %624 = vmatpush2.msra.mxu0 %v370
  %625 = vmatprep.subr.mxu0 0.0
  %626 = vmatpush2.msra.mxu0 %v369
  %627 = vmatprep.subr.mxu0 0.0
  %628 = vmatpush2.msra.mxu0 %v368
  %629 = vmatprep.subr.mxu0 0.0
  %630 = vmatpush2.msra.mxu0 %v367
  %631 = vmatprep.subr.mxu0 0.0
  %632 = vmatpush2.msra.mxu0 %v366
  %633 = vmatprep.subr.mxu0 0.0
  %634 = vmatpush2.msra.mxu0 %v365
  %635 = vmatprep.subr.mxu0 0.0
  %636 = vmatpush2.msra.mxu0 %v364
  %637 = vmatprep.subr.mxu0 0.0
  %638 = vmatpush2.msra.mxu0 %v363
  %639 = vmatprep.subr.mxu0 0.0
  %640 = vmatpush2.msra.mxu0 %v362
  %641 = vmatprep.subr.mxu0 0.0
  %642 = vmatpush2.msra.mxu0 %v361
  %643 = vmatprep.subr.mxu0 0.0
  %644 = vmatpush2.msra.mxu0 %v360
  %645 = vmatprep.subr.mxu0 0.0
  %646 = vmatpush2.msra.mxu0 %v359
  %647 = vmatprep.mubr.f32.mxu0 %v576
  %648 = vmatmul.mubr.f32.gmra.mxu0 %v575
  %v649 = vpop.f32.mrf.mxu0
  %v650 = vadd.f32 0.0, %v649
  %v651 = vpop.f32.mrf.mxu0
  %652 = vmatprep.mubr.f32.mxu0 %v578
  %653 = vmatmul.mubr.f32.gmra.mxu0 %v577
  %v654 = vpop.f32.mrf.mxu0
  %v655 = vadd.f32 0.0, %v654
  %v656 = vpop.f32.mrf.mxu0
  %657 = vmatprep.mubr.f32.mxu0 %v580
  %658 = vmatmul.mubr.f32.gmra.mxu0 %v579
  %v659 = vpop.f32.mrf.mxu0
  %v660 = vadd.f32 0.0, %v659
  %v661 = vpop.f32.mrf.mxu0
  %662 = vmatprep.mubr.f32.mxu0 %v582
  %663 = vmatmul.mubr.f32.gmra.mxu0 %v581
  %v664 = vpop.f32.mrf.mxu0
  %v665 = vadd.f32 0.0, %v664
  %v666 = vpop.f32.mrf.mxu0
  %667 = vdwg.mxu0
  %v668 = vpack.c.bf16 %v655, %v650
  %v669 = vpack.c.bf16 %v665, %v660
  %vm670 = vcmask 261120
  %v672 = vsel %vm670, %v336, 0
  %674 = vmatprep.subr.bf16.mxu0 0
  %675 = vmatpush1.bf16.msra.mxu0 0
  %676 = vmatprep.subr.bf16.mxu0 0
  %677 = vmatpush1.bf16.msra.mxu0 0
  %678 = vmatprep.subr.bf16.mxu0 0
  %679 = vmatpush1.bf16.msra.mxu0 0
  %680 = vmatprep.subr.bf16.mxu0 0
  %681 = vmatpush1.bf16.msra.mxu0 0
  %682 = vmatprep.subr.bf16.mxu0 0
  %683 = vmatpush1.bf16.msra.mxu0 0
  %684 = vmatprep.subr.bf16.mxu0 0
  %685 = vmatpush1.bf16.msra.mxu0 0
  %686 = vmatprep.subr.bf16.mxu0 0
  %687 = vmatpush1.bf16.msra.mxu0 %v669
  %688 = vmatprep.subr.bf16.mxu0 0
  %689 = vmatpush1.bf16.msra.mxu0 %v668
  %690 = vmatprep.subr.bf16.mxu0 0
  %691 = vmatpush2.bf16.msra.mxu0 0
  %692 = vmatprep.subr.bf16.mxu0 0
  %693 = vmatpush2.bf16.msra.mxu0 0
  %694 = vmatprep.subr.bf16.mxu0 0
  %695 = vmatpush2.bf16.msra.mxu0 0
  %696 = vmatprep.subr.bf16.mxu0 0
  %697 = vmatpush2.bf16.msra.mxu0 0
  %698 = vmatprep.subr.bf16.mxu0 0
  %699 = vmatpush2.bf16.msra.mxu0 0
  %700 = vmatprep.subr.bf16.mxu0 0
  %701 = vmatpush2.bf16.msra.mxu0 0
  %702 = vmatprep.subr.bf16.mxu0 0
  %703 = vmatpush2.bf16.msra.mxu0 0
  %704 = vmatprep.subr.bf16.mxu0 0
  %705 = vmatpush2.bf16.msra.mxu0 0
  %706 = vmatprep.mubr.bf16.mxu0 0
  %707 = vmatmul.mubr.bf16.gmra.mxu0 %v672
  %v708 = vpop.f32.mrf.mxu0
  %v709 = vadd.f32 0.0, %v708
  %v710 = vpop.f32.mrf.mxu0
  %v711 = vpop.f32.mrf.mxu0
  %v712 = vadd.f32 0.0, %v711
  %v713 = vpop.f32.mrf.mxu0
  %714 = vdwg.mxu0
  %716 = vset.pattern.permute.xlu0 0
  %717 = vperm.xlu0 %716, %v337
  %v718 = vpop.permute.xlu0 %717
  %721 = vset.pattern.permute.xlu0 0
  %722 = vperm.xlu0 %721, %v338
  %v723 = vpop.permute.xlu0 %722
  %v725 = vmul.f32 %v709, %v718
  %v726 = vmul.f32 %v712, %v723
  %v728 = vlaneseq
  %v729 = vshrl.u32 %v728, 7
  %v730 = vsub.s32 0, %v729
  %v731 = vrot.slane %v375, %v730
  %v733 = vadd.f32 %v725, %v731
  %v734 = vadd.f32 %v726, %v731
  %v735 = vmax.f32 %v733, 0.0
  %v736 = vmax.f32 %v734, 0.0
  %v737 = vld [vmem:[%s12] sm:$0x1]
  %738 = vmatprep.subr.mxu0 0.0
  %739 = vmatpush1.msra.mxu0 0.0
  %740 = vmatprep.subr.mxu0 0.0
  %741 = vmatpush1.msra.mxu0 0.0
  %742 = vmatprep.subr.mxu0 0.0
  %743 = vmatpush1.msra.mxu0 0.0
  %744 = vmatprep.subr.mxu0 0.0
  %745 = vmatpush1.msra.mxu0 0.0
  %746 = vmatprep.subr.mxu0 0.0
  %747 = vmatpush1.msra.mxu0 0.0
  %748 = vmatprep.subr.mxu0 0.0
  %749 = vmatpush1.msra.mxu0 0.0
  %750 = vmatprep.subr.mxu0 0.0
  %751 = vmatpush1.msra.mxu0 0.0
  %752 = vmatprep.subr.mxu0 0.0
  %753 = vmatpush1.msra.mxu0 0.0
  %754 = vmatprep.subr.mxu0 0.0
  %755 = vmatpush1.msra.mxu0 0.0
  %756 = vmatprep.subr.mxu0 0.0
  %757 = vmatpush1.msra.mxu0 0.0
  %758 = vmatprep.subr.mxu0 0.0
  %759 = vmatpush1.msra.mxu0 0.0
  %760 = vmatprep.subr.mxu0 0.0
  %761 = vmatpush1.msra.mxu0 0.0
  %762 = vmatprep.subr.mxu0 0.0
  %763 = vmatpush1.msra.mxu0 0.0
  %764 = vmatprep.subr.mxu0 0.0
  %765 = vmatpush1.msra.mxu0 0.0
  %766 = vmatprep.subr.mxu0 0.0
  %767 = vmatpush1.msra.mxu0 %v736
  %768 = vmatprep.subr.mxu0 0.0
  %769 = vmatpush1.msra.mxu0 %v735
  %770 = vmatprep.subr.mxu0 0.0
  %771 = vmatpush2.msra.mxu0 0.0
  %772 = vmatprep.subr.mxu0 0.0
  %773 = vmatpush2.msra.mxu0 0.0
  %774 = vmatprep.subr.mxu0 0.0
  %775 = vmatpush2.msra.mxu0 0.0
  %776 = vmatprep.subr.mxu0 0.0
  %777 = vmatpush2.msra.mxu0 0.0
  %778 = vmatprep.subr.mxu0 0.0
  %779 = vmatpush2.msra.mxu0 0.0
  %780 = vmatprep.subr.mxu0 0.0
  %781 = vmatpush2.msra.mxu0 0.0
  %782 = vmatprep.subr.mxu0 0.0
  %783 = vmatpush2.msra.mxu0 0.0
  %784 = vmatprep.subr.mxu0 0.0
  %785 = vmatpush2.msra.mxu0 0.0
  %786 = vmatprep.subr.mxu0 0.0
  %787 = vmatpush2.msra.mxu0 0.0
  %788 = vmatprep.subr.mxu0 0.0
  %789 = vmatpush2.msra.mxu0 0.0
  %790 = vmatprep.subr.mxu0 0.0
  %791 = vmatpush2.msra.mxu0 0.0
  %792 = vmatprep.subr.mxu0 0.0
  %793 = vmatpush2.msra.mxu0 0.0
  %794 = vmatprep.subr.mxu0 0.0
  %795 = vmatpush2.msra.mxu0 0.0
  %796 = vmatprep.subr.mxu0 0.0
  %797 = vmatpush2.msra.mxu0 0.0
  %798 = vmatprep.subr.mxu0 0.0
  %799 = vmatpush2.msra.mxu0 0.0
  %800 = vmatprep.subr.mxu0 0.0
  %801 = vmatpush2.msra.mxu0 0.0
  %802 = vmatprep.mubr.f32.mxu0 0.0
  %803 = vmatmul.mubr.f32.gmra.mxu0 %v378
  %v804 = vpop.f32.mrf.mxu0
  %v805 = vadd.f32 0.0, %v804
  %v806 = vpop.f32.mrf.mxu0
  %807 = vmatprep.mubr.f32.mxu0 0.0
  %808 = vmatmul.mubr.f32.gmra.mxu0 %v381
  %v809 = vpop.f32.mrf.mxu0
  %v810 = vadd.f32 0.0, %v809
  %v811 = vpop.f32.mrf.mxu0
  %812 = vmatprep.mubr.f32.mxu0 0.0
  %813 = vmatmul.mubr.f32.gmra.mxu0 %v384
  %v814 = vpop.f32.mrf.mxu0
  %v815 = vadd.f32 0.0, %v814
  %v816 = vpop.f32.mrf.mxu0
  %817 = vmatprep.mubr.f32.mxu0 0.0
  %818 = vmatmul.mubr.f32.gmra.mxu0 %v387
  %v819 = vpop.f32.mrf.mxu0
  %v820 = vadd.f32 0.0, %v819
  %v821 = vpop.f32.mrf.mxu0
  %822 = vdwg.mxu0
  %v824 = vsel %vm376, %v805, 0
  %v827 = vsel %vm376, %v810, 0
  %v830 = vsel %vm376, %v815, 0
  %v833 = vsel %vm376, %v820, 0
  %835 = vmatprep.subr.mxu0 0.0
  %836 = vmatpush1.msra.mxu0 0.0
  %837 = vmatprep.subr.mxu0 0.0
  %838 = vmatpush1.msra.mxu0 0.0
  %839 = vmatprep.subr.mxu0 0.0
  %840 = vmatpush1.msra.mxu0 0.0
  %841 = vmatprep.subr.mxu0 0.0
  %842 = vmatpush1.msra.mxu0 0.0
  %843 = vmatprep.subr.mxu0 0.0
  %844 = vmatpush1.msra.mxu0 0.0
  %845 = vmatprep.subr.mxu0 0.0
  %846 = vmatpush1.msra.mxu0 0.0
  %847 = vmatprep.subr.mxu0 0.0
  %848 = vmatpush1.msra.mxu0 0.0
  %849 = vmatprep.subr.mxu0 0.0
  %850 = vmatpush1.msra.mxu0 0.0
  %851 = vmatprep.subr.mxu0 0.0
  %852 = vmatpush1.msra.mxu0 0.0
  %853 = vmatprep.subr.mxu0 0.0
  %854 = vmatpush1.msra.mxu0 0.0
  %855 = vmatprep.subr.mxu0 0.0
  %856 = vmatpush1.msra.mxu0 0.0
  %857 = vmatprep.subr.mxu0 0.0
  %858 = vmatpush1.msra.mxu0 0.0
  %859 = vmatprep.subr.mxu0 0.0
  %860 = vmatpush1.msra.mxu0 0.0
  %861 = vmatprep.subr.mxu0 0.0
  %862 = vmatpush1.msra.mxu0 0.0
  %863 = vmatprep.subr.mxu0 %v342
  %864 = vmatpush1.msra.mxu0 %v341
  %865 = vmatprep.subr.mxu0 %v340
  %866 = vmatpush1.msra.mxu0 %v339
  %867 = vmatprep.subr.mxu0 0.0
  %868 = vmatpush2.msra.mxu0 0.0
  %869 = vmatprep.subr.mxu0 0.0
  %870 = vmatpush2.msra.mxu0 0.0
  %871 = vmatprep.subr.mxu0 0.0
  %872 = vmatpush2.msra.mxu0 0.0
  %873 = vmatprep.subr.mxu0 0.0
  %874 = vmatpush2.msra.mxu0 0.0
  %875 = vmatprep.subr.mxu0 0.0
  %876 = vmatpush2.msra.mxu0 0.0
  %877 = vmatprep.subr.mxu0 0.0
  %878 = vmatpush2.msra.mxu0 0.0
  %879 = vmatprep.subr.mxu0 0.0
  %880 = vmatpush2.msra.mxu0 0.0
  %881 = vmatprep.subr.mxu0 0.0
  %882 = vmatpush2.msra.mxu0 0.0
  %883 = vmatprep.subr.mxu0 0.0
  %884 = vmatpush2.msra.mxu0 0.0
  %885 = vmatprep.subr.mxu0 0.0
  %886 = vmatpush2.msra.mxu0 0.0
  %887 = vmatprep.subr.mxu0 0.0
  %888 = vmatpush2.msra.mxu0 0.0
  %889 = vmatprep.subr.mxu0 0.0
  %890 = vmatpush2.msra.mxu0 0.0
  %891 = vmatprep.subr.mxu0 0.0
  %892 = vmatpush2.msra.mxu0 0.0
  %893 = vmatprep.subr.mxu0 0.0
  %894 = vmatpush2.msra.mxu0 0.0
  %895 = vmatprep.subr.mxu0 0.0
  %896 = vmatpush2.msra.mxu0 0.0
  %897 = vmatprep.subr.mxu0 0.0
  %898 = vmatpush2.msra.mxu0 0.0
  %899 = vmatprep.mubr.f32.mxu0 0.0
  %900 = vmatmul.mubr.f32.gmra.mxu0 %v824
  %v901 = vpop.f32.mrf.mxu0
  %v902 = vadd.f32 0.0, %v901
  %v903 = vpop.f32.mrf.mxu0
  %v904 = vadd.f32 0.0, %v903
  %905 = vmatprep.mubr.f32.mxu0 0.0
  %906 = vmatmul.mubr.f32.gmra.mxu0 %v827
  %v907 = vpop.f32.mrf.mxu0
  %v908 = vadd.f32 0.0, %v907
  %v909 = vpop.f32.mrf.mxu0
  %v910 = vadd.f32 0.0, %v909
  %911 = vmatprep.mubr.f32.mxu0 0.0
  %912 = vmatmul.mubr.f32.gmra.mxu0 %v830
  %v913 = vpop.f32.mrf.mxu0
  %v914 = vadd.f32 0.0, %v913
  %v915 = vpop.f32.mrf.mxu0
  %v916 = vadd.f32 0.0, %v915
  %917 = vmatprep.mubr.f32.mxu0 0.0
  %918 = vmatmul.mubr.f32.gmra.mxu0 %v833
  %v919 = vpop.f32.mrf.mxu0
  %v920 = vadd.f32 0.0, %v919
  %v921 = vpop.f32.mrf.mxu0
  %v922 = vadd.f32 0.0, %v921
  %923 = vdwg.mxu0
  %v924 = vmul.f32 %v902, %v284
  %v925 = vmul.f32 %v904, %v285
  %v926 = vmul.f32 %v908, %v286
  %v927 = vmul.f32 %v910, %v287
  %v928 = vmul.f32 %v914, %v288
  %v929 = vmul.f32 %v916, %v289
  %v930 = vmul.f32 %v920, %v290
  %v931 = vmul.f32 %v922, %v291
  %932 = vmatprep.subr.mxu0 0.0
  %933 = vmatpush1.msra.mxu0 %v358
  %934 = vmatprep.subr.mxu0 0.0
  %935 = vmatpush1.msra.mxu0 %v357
  %936 = vmatprep.subr.mxu0 0.0
  %937 = vmatpush1.msra.mxu0 %v356
  %938 = vmatprep.subr.mxu0 0.0
  %939 = vmatpush1.msra.mxu0 %v355
  %940 = vmatprep.subr.mxu0 0.0
  %941 = vmatpush1.msra.mxu0 %v354
  %942 = vmatprep.subr.mxu0 0.0
  %943 = vmatpush1.msra.mxu0 %v353
  %944 = vmatprep.subr.mxu0 0.0
  %945 = vmatpush1.msra.mxu0 %v352
  %946 = vmatprep.subr.mxu0 0.0
  %947 = vmatpush1.msra.mxu0 %v351
  %948 = vmatprep.subr.mxu0 0.0
  %949 = vmatpush1.msra.mxu0 %v350
  %950 = vmatprep.subr.mxu0 0.0
  %951 = vmatpush1.msra.mxu0 %v349
  %952 = vmatprep.subr.mxu0 0.0
  %953 = vmatpush1.msra.mxu0 %v348
  %954 = vmatprep.subr.mxu0 0.0
  %955 = vmatpush1.msra.mxu0 %v347
  %956 = vmatprep.subr.mxu0 0.0
  %957 = vmatpush1.msra.mxu0 %v346
  %958 = vmatprep.subr.mxu0 0.0
  %959 = vmatpush1.msra.mxu0 %v345
  %960 = vmatprep.subr.mxu0 0.0
  %961 = vmatpush1.msra.mxu0 %v344
  %962 = vmatprep.subr.mxu0 0.0
  %963 = vmatpush1.msra.mxu0 %v343
  %964 = vmatprep.subr.mxu0 0.0
  %965 = vmatpush2.msra.mxu0 %v374
  %966 = vmatprep.subr.mxu0 0.0
  %967 = vmatpush2.msra.mxu0 %v373
  %968 = vmatprep.subr.mxu0 0.0
  %969 = vmatpush2.msra.mxu0 %v372
  %970 = vmatprep.subr.mxu0 0.0
  %971 = vmatpush2.msra.mxu0 %v371
  %972 = vmatprep.subr.mxu0 0.0
  %973 = vmatpush2.msra.mxu0 %v370
  %974 = vmatprep.subr.mxu0 0.0
  %975 = vmatpush2.msra.mxu0 %v369
  %976 = vmatprep.subr.mxu0 0.0
  %977 = vmatpush2.msra.mxu0 %v368
  %978 = vmatprep.subr.mxu0 0.0
  %979 = vmatpush2.msra.mxu0 %v367
  %980 = vmatprep.subr.mxu0 0.0
  %981 = vmatpush2.msra.mxu0 %v366
  %982 = vmatprep.subr.mxu0 0.0
  %983 = vmatpush2.msra.mxu0 %v365
  %984 = vmatprep.subr.mxu0 0.0
  %985 = vmatpush2.msra.mxu0 %v364
  %986 = vmatprep.subr.mxu0 0.0
  %987 = vmatpush2.msra.mxu0 %v363
  %988 = vmatprep.subr.mxu0 0.0
  %989 = vmatpush2.msra.mxu0 %v362
  %990 = vmatprep.subr.mxu0 0.0
  %991 = vmatpush2.msra.mxu0 %v361
  %992 = vmatprep.subr.mxu0 0.0
  %993 = vmatpush2.msra.mxu0 %v360
  %994 = vmatprep.subr.mxu0 0.0
  %995 = vmatpush2.msra.mxu0 %v359
  %996 = vmatprep.mubr.f32.mxu0 %v925
  %997 = vmatmul.mubr.f32.gmra.mxu0 %v924
  %v998 = vpop.f32.mrf.mxu0
  %v999 = vadd.f32 0.0, %v998
  %v1000 = vpop.f32.mrf.mxu0
  %1001 = vmatprep.mubr.f32.mxu0 %v927
  %1002 = vmatmul.mubr.f32.gmra.mxu0 %v926
  %v1003 = vpop.f32.mrf.mxu0
  %v1004 = vadd.f32 0.0, %v1003
  %v1005 = vpop.f32.mrf.mxu0
  %1006 = vmatprep.mubr.f32.mxu0 %v929
  %1007 = vmatmul.mubr.f32.gmra.mxu0 %v928
  %v1008 = vpop.f32.mrf.mxu0
  %v1009 = vadd.f32 0.0, %v1008
  %v1010 = vpop.f32.mrf.mxu0
  %1011 = vmatprep.mubr.f32.mxu0 %v931
  %1012 = vmatmul.mubr.f32.gmra.mxu0 %v930
  %v1013 = vpop.f32.mrf.mxu0
  %v1014 = vadd.f32 0.0, %v1013
  %v1015 = vpop.f32.mrf.mxu0
  %1016 = vdwg.mxu0
  %v1017 = vpack.c.bf16 %v1004, %v999
  %v1018 = vpack.c.bf16 %v1014, %v1009
  %1019 = vmatprep.subr.bf16.mxu0 0
  %1020 = vmatpush1.bf16.msra.mxu0 0
  %1021 = vmatprep.subr.bf16.mxu0 0
  %1022 = vmatpush1.bf16.msra.mxu0 0
  %1023 = vmatprep.subr.bf16.mxu0 0
  %1024 = vmatpush1.bf16.msra.mxu0 0
  %1025 = vmatprep.subr.bf16.mxu0 0
  %1026 = vmatpush1.bf16.msra.mxu0 0
  %1027 = vmatprep.subr.bf16.mxu0 0
  %1028 = vmatpush1.bf16.msra.mxu0 0
  %1029 = vmatprep.subr.bf16.mxu0 0
  %1030 = vmatpush1.bf16.msra.mxu0 0
  %1031 = vmatprep.subr.bf16.mxu0 0
  %1032 = vmatpush1.bf16.msra.mxu0 %v1018
  %1033 = vmatprep.subr.bf16.mxu0 0
  %1034 = vmatpush1.bf16.msra.mxu0 %v1017
  %1035 = vmatprep.subr.bf16.mxu0 0
  %1036 = vmatpush2.bf16.msra.mxu0 0
  %1037 = vmatprep.subr.bf16.mxu0 0
  %1038 = vmatpush2.bf16.msra.mxu0 0
  %1039 = vmatprep.subr.bf16.mxu0 0
  %1040 = vmatpush2.bf16.msra.mxu0 0
  %1041 = vmatprep.subr.bf16.mxu0 0
  %1042 = vmatpush2.bf16.msra.mxu0 0
  %1043 = vmatprep.subr.bf16.mxu0 0
  %1044 = vmatpush2.bf16.msra.mxu0 0
  %1045 = vmatprep.subr.bf16.mxu0 0
  %1046 = vmatpush2.bf16.msra.mxu0 0
  %1047 = vmatprep.subr.bf16.mxu0 0
  %1048 = vmatpush2.bf16.msra.mxu0 0
  %1049 = vmatprep.subr.bf16.mxu0 0
  %1050 = vmatpush2.bf16.msra.mxu0 0
  %1051 = vmatprep.mubr.bf16.mxu0 0
  %1052 = vmatmul.mubr.bf16.gmra.mxu0 %v672
  %v1053 = vpop.f32.mrf.mxu0
  %v1054 = vadd.f32 0.0, %v1053
  %v1055 = vpop.f32.mrf.mxu0
  %v1056 = vpop.f32.mrf.mxu0
  %v1057 = vadd.f32 0.0, %v1056
  %v1058 = vpop.f32.mrf.mxu0
  %1059 = vdwg.mxu0
  %v1060 = vmul.f32 %v1054, %v718
  %v1061 = vmul.f32 %v1057, %v723
  %v1063 = vlaneseq
  %v1064 = vshrl.u32 %v1063, 7
  %v1065 = vsub.s32 0, %v1064
  %v1066 = vrot.slane %v737, %v1065
  %v1068 = vadd.f32 %v1060, %v1066
  %v1069 = vadd.f32 %v1061, %v1066
  %v1070 = vmax.f32 %v1068, 0.0
  %v1071 = vmax.f32 %v1069, 0.0
  %v1072 = vld [vmem:[%s2] sm:$0xff]
  %v1073 = vld [vmem:[%s2 + $0x8] sm:$0xff]
  %v1074 = vld [vmem:[%s2 + $0x10] sm:$0xff]
  %1075 = vset.pattern.permute.xlu0 0
  %1076 = vperm.xlu0 %1075, %v1072
  %v1077 = vpop.permute.xlu0 %1076
  %1078 = vset.pattern.permute.xlu0 0
  %1079 = vperm.xlu0 %1078, %v1073
  %v1080 = vpop.permute.xlu0 %1079
  %1081 = vset.pattern.permute.xlu0 0
  %1082 = vperm.xlu0 %1081, %v1074
  %v1083 = vpop.permute.xlu0 %1082
  %vm1084 = vcmp.eq.s32.totalorder %v1077, %v297
  %vm1085 = vcmp.eq.s32.totalorder %v1080, %v297
  %vm1086 = vcmp.eq.s32.totalorder %v1083, %v297
  %v1087 = vsel %vm1084, 1, 0
  %v1088 = vsel %vm1085, 1, 0
  %v1089 = vsel %vm1086, 1, 0
  %v1090 = vcvt.s32.f32 %v1087
  %v1091 = vcvt.s32.f32 %v1088
  %v1092 = vcvt.s32.f32 %v1089
  %v1093 = vld [vmem:[%s3] sm:$0xff]
  %v1094 = vld [vmem:[%s3 + $0x8] sm:$0xff]
  %v1095 = vld [vmem:[%s3 + $0x10] sm:$0xff]
  %1096 = vset.pattern.permute.xlu0 0
  %1097 = vperm.xlu0 %1096, %v1093
  %v1098 = vpop.permute.xlu0 %1097
  %1099 = vset.pattern.permute.xlu0 0
  %1100 = vperm.xlu0 %1099, %v1094
  %v1101 = vpop.permute.xlu0 %1100
  %1102 = vset.pattern.permute.xlu0 0
  %1103 = vperm.xlu0 %1102, %v1095
  %v1104 = vpop.permute.xlu0 %1103
  %vm1105 = vcmp.eq.s32.totalorder %v1098, %v297
  %vm1106 = vcmp.eq.s32.totalorder %v1101, %v297
  %vm1107 = vcmp.eq.s32.totalorder %v1104, %v297
  %v1108 = vsel %vm1105, 1, 0
  %v1109 = vsel %vm1106, 1, 0
  %v1110 = vsel %vm1107, 1, 0
  %v1111 = vcvt.s32.f32 %v1108
  %v1112 = vcvt.s32.f32 %v1109
  %v1113 = vcvt.s32.f32 %v1110
  %v1115 = vsel %vm376, %v1090, 0
  %v1118 = vsel %vm376, %v1091, 0
  %v1121 = vsel %vm376, %v1092, 0
  %1123 = vmatprep.subr.mxu0 0.0
  %1124 = vmatpush1.msra.mxu0 0.0
  %1125 = vmatprep.subr.mxu0 0.0
  %1126 = vmatpush1.msra.mxu0 0.0
  %1127 = vmatprep.subr.mxu0 0.0
  %1128 = vmatpush1.msra.mxu0 0.0
  %1129 = vmatprep.subr.mxu0 0.0
  %1130 = vmatpush1.msra.mxu0 0.0
  %1131 = vmatprep.subr.mxu0 0.0
  %1132 = vmatpush1.msra.mxu0 0.0
  %1133 = vmatprep.subr.mxu0 0.0
  %1134 = vmatpush1.msra.mxu0 0.0
  %1135 = vmatprep.subr.mxu0 0.0
  %1136 = vmatpush1.msra.mxu0 0.0
  %1137 = vmatprep.subr.mxu0 0.0
  %1138 = vmatpush1.msra.mxu0 0.0
  %1139 = vmatprep.subr.mxu0 0.0
  %1140 = vmatpush1.msra.mxu0 0.0
  %1141 = vmatprep.subr.mxu0 0.0
  %1142 = vmatpush1.msra.mxu0 0.0
  %1143 = vmatprep.subr.mxu0 0.0
  %1144 = vmatpush1.msra.mxu0 0.0
  %1145 = vmatprep.subr.mxu0 0.0
  %1146 = vmatpush1.msra.mxu0 0.0
  %1147 = vmatprep.subr.mxu0 0.0
  %1148 = vmatpush1.msra.mxu0 0.0
  %1149 = vmatprep.subr.mxu0 0.0
  %1150 = vmatpush1.msra.mxu0 0.0
  %1151 = vmatprep.subr.mxu0 0.0
  %1152 = vmatpush1.msra.mxu0 %v1071
  %1153 = vmatprep.subr.mxu0 0.0
  %1154 = vmatpush1.msra.mxu0 %v1070
  %1155 = vmatprep.subr.mxu0 0.0
  %1156 = vmatpush2.msra.mxu0 0.0
  %1157 = vmatprep.subr.mxu0 0.0
  %1158 = vmatpush2.msra.mxu0 0.0
  %1159 = vmatprep.subr.mxu0 0.0
  %1160 = vmatpush2.msra.mxu0 0.0
  %1161 = vmatprep.subr.mxu0 0.0
  %1162 = vmatpush2.msra.mxu0 0.0
  %1163 = vmatprep.subr.mxu0 0.0
  %1164 = vmatpush2.msra.mxu0 0.0
  %1165 = vmatprep.subr.mxu0 0.0
  %1166 = vmatpush2.msra.mxu0 0.0
  %1167 = vmatprep.subr.mxu0 0.0
  %1168 = vmatpush2.msra.mxu0 0.0
  %1169 = vmatprep.subr.mxu0 0.0
  %1170 = vmatpush2.msra.mxu0 0.0
  %1171 = vmatprep.subr.mxu0 0.0
  %1172 = vmatpush2.msra.mxu0 0.0
  %1173 = vmatprep.subr.mxu0 0.0
  %1174 = vmatpush2.msra.mxu0 0.0
  %1175 = vmatprep.subr.mxu0 0.0
  %1176 = vmatpush2.msra.mxu0 0.0
  %1177 = vmatprep.subr.mxu0 0.0
  %1178 = vmatpush2.msra.mxu0 0.0
  %1179 = vmatprep.subr.mxu0 0.0
  %1180 = vmatpush2.msra.mxu0 0.0
  %1181 = vmatprep.subr.mxu0 0.0
  %1182 = vmatpush2.msra.mxu0 0.0
  %1183 = vmatprep.subr.mxu0 0.0
  %1184 = vmatpush2.msra.mxu0 0.0
  %1185 = vmatprep.subr.mxu0 0.0
  %1186 = vmatpush2.msra.mxu0 0.0
  %1187 = vmatprep.mubr.f32.mxu0 0.0
  %1188 = vmatmul.mubr.f32.gmra.mxu0 %v1115
  %v1189 = vpop.f32.mrf.mxu0
  %v1190 = vadd.f32 0.0, %v1189
  %v1191 = vpop.f32.mrf.mxu0
  %1192 = vmatprep.mubr.f32.mxu0 0.0
  %1193 = vmatmul.mubr.f32.gmra.mxu0 %v1118
  %v1194 = vpop.f32.mrf.mxu0
  %v1195 = vadd.f32 0.0, %v1194
  %v1196 = vpop.f32.mrf.mxu0
  %1197 = vmatprep.mubr.f32.mxu0 0.0
  %1198 = vmatmul.mubr.f32.gmra.mxu0 %v1121
  %v1199 = vpop.f32.mrf.mxu0
  %v1200 = vadd.f32 0.0, %v1199
  %v1201 = vpop.f32.mrf.mxu0
  %1202 = vdwg.mxu0
  %v1204 = vsel %vm376, %v1111, 0
  %v1207 = vsel %vm376, %v1112, 0
  %v1210 = vsel %vm376, %v1113, 0
  %1212 = vmatprep.subr.mxu0 0.0
  %1213 = vmatpush1.msra.mxu0 0.0
  %1214 = vmatprep.subr.mxu0 0.0
  %1215 = vmatpush1.msra.mxu0 0.0
  %1216 = vmatprep.subr.mxu0 0.0
  %1217 = vmatpush1.msra.mxu0 0.0
  %1218 = vmatprep.subr.mxu0 0.0
  %1219 = vmatpush1.msra.mxu0 0.0
  %1220 = vmatprep.subr.mxu0 0.0
  %1221 = vmatpush1.msra.mxu0 0.0
  %1222 = vmatprep.subr.mxu0 0.0
  %1223 = vmatpush1.msra.mxu0 0.0
  %1224 = vmatprep.subr.mxu0 0.0
  %1225 = vmatpush1.msra.mxu0 0.0
  %1226 = vmatprep.subr.mxu0 0.0
  %1227 = vmatpush1.msra.mxu0 0.0
  %1228 = vmatprep.subr.mxu0 0.0
  %1229 = vmatpush1.msra.mxu0 0.0
  %1230 = vmatprep.subr.mxu0 0.0
  %1231 = vmatpush1.msra.mxu0 0.0
  %1232 = vmatprep.subr.mxu0 0.0
  %1233 = vmatpush1.msra.mxu0 0.0
  %1234 = vmatprep.subr.mxu0 0.0
  %1235 = vmatpush1.msra.mxu0 0.0
  %1236 = vmatprep.subr.mxu0 0.0
  %1237 = vmatpush1.msra.mxu0 0.0
  %1238 = vmatprep.subr.mxu0 0.0
  %1239 = vmatpush1.msra.mxu0 0.0
  %1240 = vmatprep.subr.mxu0 0.0
  %1241 = vmatpush1.msra.mxu0 %v1071
  %1242 = vmatprep.subr.mxu0 0.0
  %1243 = vmatpush1.msra.mxu0 %v1070
  %1244 = vmatprep.subr.mxu0 0.0
  %1245 = vmatpush2.msra.mxu0 0.0
  %1246 = vmatprep.subr.mxu0 0.0
  %1247 = vmatpush2.msra.mxu0 0.0
  %1248 = vmatprep.subr.mxu0 0.0
  %1249 = vmatpush2.msra.mxu0 0.0
  %1250 = vmatprep.subr.mxu0 0.0
  %1251 = vmatpush2.msra.mxu0 0.0
  %1252 = vmatprep.subr.mxu0 0.0
  %1253 = vmatpush2.msra.mxu0 0.0
  %1254 = vmatprep.subr.mxu0 0.0
  %1255 = vmatpush2.msra.mxu0 0.0
  %1256 = vmatprep.subr.mxu0 0.0
  %1257 = vmatpush2.msra.mxu0 0.0
  %1258 = vmatprep.subr.mxu0 0.0
  %1259 = vmatpush2.msra.mxu0 0.0
  %1260 = vmatprep.subr.mxu0 0.0
  %1261 = vmatpush2.msra.mxu0 0.0
  %1262 = vmatprep.subr.mxu0 0.0
  %1263 = vmatpush2.msra.mxu0 0.0
  %1264 = vmatprep.subr.mxu0 0.0
  %1265 = vmatpush2.msra.mxu0 0.0
  %1266 = vmatprep.subr.mxu0 0.0
  %1267 = vmatpush2.msra.mxu0 0.0
  %1268 = vmatprep.subr.mxu0 0.0
  %1269 = vmatpush2.msra.mxu0 0.0
  %1270 = vmatprep.subr.mxu0 0.0
  %1271 = vmatpush2.msra.mxu0 0.0
  %1272 = vmatprep.subr.mxu0 0.0
  %1273 = vmatpush2.msra.mxu0 0.0
  %1274 = vmatprep.subr.mxu0 0.0
  %1275 = vmatpush2.msra.mxu0 0.0
  %1276 = vmatprep.mubr.f32.mxu0 0.0
  %1277 = vmatmul.mubr.f32.gmra.mxu0 %v1204
  %v1278 = vpop.f32.mrf.mxu0
  %v1279 = vadd.f32 0.0, %v1278
  %v1280 = vpop.f32.mrf.mxu0
  %1281 = vmatprep.mubr.f32.mxu0 0.0
  %1282 = vmatmul.mubr.f32.gmra.mxu0 %v1207
  %v1283 = vpop.f32.mrf.mxu0
  %v1284 = vadd.f32 0.0, %v1283
  %v1285 = vpop.f32.mrf.mxu0
  %1286 = vmatprep.mubr.f32.mxu0 0.0
  %1287 = vmatmul.mubr.f32.gmra.mxu0 %v1210
  %v1288 = vpop.f32.mrf.mxu0
  %v1289 = vadd.f32 0.0, %v1288
  %v1290 = vpop.f32.mrf.mxu0
  %1291 = vdwg.mxu0
  %v1292 = vld [vmem:[%s13] sm:$0xff]
  %v1293 = vld [vmem:[%s13 + $0x8] sm:$0xff]
  %v1294 = vld [vmem:[%s14] sm:$0xff]
  %v1295 = vld [vmem:[%s14 + $0x8] sm:$0xff]
  %v1297 = vsel %vm376, %v1279, 0
  %v1300 = vsel %vm376, %v1284, 0
  %v1303 = vsel %vm376, %v1289, 0
  %1305 = vmatprep.subr.mxu0 0.0
  %1306 = vmatpush1.msra.mxu0 0.0
  %1307 = vmatprep.subr.mxu0 0.0
  %1308 = vmatpush1.msra.mxu0 0.0
  %1309 = vmatprep.subr.mxu0 0.0
  %1310 = vmatpush1.msra.mxu0 0.0
  %1311 = vmatprep.subr.mxu0 0.0
  %1312 = vmatpush1.msra.mxu0 0.0
  %1313 = vmatprep.subr.mxu0 0.0
  %1314 = vmatpush1.msra.mxu0 0.0
  %1315 = vmatprep.subr.mxu0 0.0
  %1316 = vmatpush1.msra.mxu0 0.0
  %1317 = vmatprep.subr.mxu0 0.0
  %1318 = vmatpush1.msra.mxu0 0.0
  %1319 = vmatprep.subr.mxu0 0.0
  %1320 = vmatpush1.msra.mxu0 0.0
  %1321 = vmatprep.subr.mxu0 0.0
  %1322 = vmatpush1.msra.mxu0 0.0
  %1323 = vmatprep.subr.mxu0 0.0
  %1324 = vmatpush1.msra.mxu0 0.0
  %1325 = vmatprep.subr.mxu0 0.0
  %1326 = vmatpush1.msra.mxu0 0.0
  %1327 = vmatprep.subr.mxu0 0.0
  %1328 = vmatpush1.msra.mxu0 0.0
  %1329 = vmatprep.subr.mxu0 0.0
  %1330 = vmatpush1.msra.mxu0 0.0
  %1331 = vmatprep.subr.mxu0 0.0
  %1332 = vmatpush1.msra.mxu0 0.0
  %1333 = vmatprep.subr.mxu0 0.0
  %1334 = vmatpush1.msra.mxu0 %v1295
  %1335 = vmatprep.subr.mxu0 0.0
  %1336 = vmatpush1.msra.mxu0 %v1294
  %1337 = vmatprep.subr.mxu0 0.0
  %1338 = vmatpush2.msra.mxu0 0.0
  %1339 = vmatprep.subr.mxu0 0.0
  %1340 = vmatpush2.msra.mxu0 0.0
  %1341 = vmatprep.subr.mxu0 0.0
  %1342 = vmatpush2.msra.mxu0 0.0
  %1343 = vmatprep.subr.mxu0 0.0
  %1344 = vmatpush2.msra.mxu0 0.0
  %1345 = vmatprep.subr.mxu0 0.0
  %1346 = vmatpush2.msra.mxu0 0.0
  %1347 = vmatprep.subr.mxu0 0.0
  %1348 = vmatpush2.msra.mxu0 0.0
  %1349 = vmatprep.subr.mxu0 0.0
  %1350 = vmatpush2.msra.mxu0 0.0
  %1351 = vmatprep.subr.mxu0 0.0
  %1352 = vmatpush2.msra.mxu0 0.0
  %1353 = vmatprep.subr.mxu0 0.0
  %1354 = vmatpush2.msra.mxu0 0.0
  %1355 = vmatprep.subr.mxu0 0.0
  %1356 = vmatpush2.msra.mxu0 0.0
  %1357 = vmatprep.subr.mxu0 0.0
  %1358 = vmatpush2.msra.mxu0 0.0
  %1359 = vmatprep.subr.mxu0 0.0
  %1360 = vmatpush2.msra.mxu0 0.0
  %1361 = vmatprep.subr.mxu0 0.0
  %1362 = vmatpush2.msra.mxu0 0.0
  %1363 = vmatprep.subr.mxu0 0.0
  %1364 = vmatpush2.msra.mxu0 0.0
  %1365 = vmatprep.subr.mxu0 0.0
  %1366 = vmatpush2.msra.mxu0 0.0
  %1367 = vmatprep.subr.mxu0 0.0
  %1368 = vmatpush2.msra.mxu0 0.0
  %1369 = vmatprep.mubr.f32.mxu0 0.0
  %1370 = vmatmul.mubr.f32.gmra.mxu0 %v1297
  %v1371 = vpop.f32.mrf.mxu0
  %v1372 = vadd.f32 0.0, %v1371
  %v1373 = vpop.f32.mrf.mxu0
  %1374 = vmatprep.mubr.f32.mxu0 0.0
  %1375 = vmatmul.mubr.f32.gmra.mxu0 %v1300
  %v1376 = vpop.f32.mrf.mxu0
  %v1377 = vadd.f32 0.0, %v1376
  %v1378 = vpop.f32.mrf.mxu0
  %1379 = vmatprep.mubr.f32.mxu0 0.0
  %1380 = vmatmul.mubr.f32.gmra.mxu0 %v1303
  %v1381 = vpop.f32.mrf.mxu0
  %v1382 = vadd.f32 0.0, %v1381
  %v1383 = vpop.f32.mrf.mxu0
  %1384 = vdwg.mxu0
  %v1386 = vsel %vm376, %v1190, 0
  %v1389 = vsel %vm376, %v1195, 0
  %v1392 = vsel %vm376, %v1200, 0
  %1394 = vmatprep.subr.mxu0 0.0
  %1395 = vmatpush1.msra.mxu0 0.0
  %1396 = vmatprep.subr.mxu0 0.0
  %1397 = vmatpush1.msra.mxu0 0.0
  %1398 = vmatprep.subr.mxu0 0.0
  %1399 = vmatpush1.msra.mxu0 0.0
  %1400 = vmatprep.subr.mxu0 0.0
  %1401 = vmatpush1.msra.mxu0 0.0
  %1402 = vmatprep.subr.mxu0 0.0
  %1403 = vmatpush1.msra.mxu0 0.0
  %1404 = vmatprep.subr.mxu0 0.0
  %1405 = vmatpush1.msra.mxu0 0.0
  %1406 = vmatprep.subr.mxu0 0.0
  %1407 = vmatpush1.msra.mxu0 0.0
  %1408 = vmatprep.subr.mxu0 0.0
  %1409 = vmatpush1.msra.mxu0 0.0
  %1410 = vmatprep.subr.mxu0 0.0
  %1411 = vmatpush1.msra.mxu0 0.0
  %1412 = vmatprep.subr.mxu0 0.0
  %1413 = vmatpush1.msra.mxu0 0.0
  %1414 = vmatprep.subr.mxu0 0.0
  %1415 = vmatpush1.msra.mxu0 0.0
  %1416 = vmatprep.subr.mxu0 0.0
  %1417 = vmatpush1.msra.mxu0 0.0
  %1418 = vmatprep.subr.mxu0 0.0
  %1419 = vmatpush1.msra.mxu0 0.0
  %1420 = vmatprep.subr.mxu0 0.0
  %1421 = vmatpush1.msra.mxu0 0.0
  %1422 = vmatprep.subr.mxu0 0.0
  %1423 = vmatpush1.msra.mxu0 %v1293
  %1424 = vmatprep.subr.mxu0 0.0
  %1425 = vmatpush1.msra.mxu0 %v1292
  %1426 = vmatprep.subr.mxu0 0.0
  %1427 = vmatpush2.msra.mxu0 0.0
  %1428 = vmatprep.subr.mxu0 0.0
  %1429 = vmatpush2.msra.mxu0 0.0
  %1430 = vmatprep.subr.mxu0 0.0
  %1431 = vmatpush2.msra.mxu0 0.0
  %1432 = vmatprep.subr.mxu0 0.0
  %1433 = vmatpush2.msra.mxu0 0.0
  %1434 = vmatprep.subr.mxu0 0.0
  %1435 = vmatpush2.msra.mxu0 0.0
  %1436 = vmatprep.subr.mxu0 0.0
  %1437 = vmatpush2.msra.mxu0 0.0
  %1438 = vmatprep.subr.mxu0 0.0
  %1439 = vmatpush2.msra.mxu0 0.0
  %1440 = vmatprep.subr.mxu0 0.0
  %1441 = vmatpush2.msra.mxu0 0.0
  %1442 = vmatprep.subr.mxu0 0.0
  %1443 = vmatpush2.msra.mxu0 0.0
  %1444 = vmatprep.subr.mxu0 0.0
  %1445 = vmatpush2.msra.mxu0 0.0
  %1446 = vmatprep.subr.mxu0 0.0
  %1447 = vmatpush2.msra.mxu0 0.0
  %1448 = vmatprep.subr.mxu0 0.0
  %1449 = vmatpush2.msra.mxu0 0.0
  %1450 = vmatprep.subr.mxu0 0.0
  %1451 = vmatpush2.msra.mxu0 0.0
  %1452 = vmatprep.subr.mxu0 0.0
  %1453 = vmatpush2.msra.mxu0 0.0
  %1454 = vmatprep.subr.mxu0 0.0
  %1455 = vmatpush2.msra.mxu0 0.0
  %1456 = vmatprep.subr.mxu0 0.0
  %1457 = vmatpush2.msra.mxu0 0.0
  %1458 = vmatprep.mubr.f32.mxu0 0.0
  %1459 = vmatmul.mubr.f32.gmra.mxu0 %v1386
  %v1460 = vpop.f32.mrf.mxu0
  %v1461 = vadd.f32 %v1372, %v1460
  %v1462 = vpop.f32.mrf.mxu0
  %1463 = vmatprep.mubr.f32.mxu0 0.0
  %1464 = vmatmul.mubr.f32.gmra.mxu0 %v1389
  %v1465 = vpop.f32.mrf.mxu0
  %v1466 = vadd.f32 %v1377, %v1465
  %v1467 = vpop.f32.mrf.mxu0
  %1468 = vmatprep.mubr.f32.mxu0 0.0
  %1469 = vmatmul.mubr.f32.gmra.mxu0 %v1392
  %v1470 = vpop.f32.mrf.mxu0
  %v1471 = vadd.f32 %v1382, %v1470
  %v1472 = vpop.f32.mrf.mxu0
  %1473 = vdwg.mxu0
  %v1474 = vld [vmem:[%s15] sm:$0x1]
  %v1476 = vlaneseq
  %v1477 = vshrl.u32 %v1476, 7
  %v1478 = vsub.s32 0, %v1477
  %v1479 = vrot.slane %v1474, %v1478
  %v1481 = vadd.f32 %v1461, %v1479
  %v1482 = vadd.f32 %v1466, %v1479
  %v1483 = vadd.f32 %v1471, %v1479
  %v1484 = vmax.f32 %v1481, 0.0
  %v1485 = vmax.f32 %v1482, 0.0
  %v1486 = vmax.f32 %v1483, 0.0
  %v1487 = vld [vmem:[%s16] sm:$0xff]
  %v1488 = vld [vmem:[%s16 + $0x8] sm:$0xff]
  %v1489 = vld [vmem:[%s17] sm:$0x1]
  %v1491 = vlaneseq
  %v1492 = vshrl.u32 %v1491, 7
  %v1493 = vsub.s32 0, %v1492
  %v1494 = vrot.slane %v1489, %v1493
  %v1497 = vsel %vm376, %v1484, 0
  %v1500 = vsel %vm376, %v1485, 0
  %v1503 = vsel %vm376, %v1486, 0
  %1505 = vmatprep.subr.mxu0 0.0
  %1506 = vmatpush1.msra.mxu0 0.0
  %1507 = vmatprep.subr.mxu0 0.0
  %1508 = vmatpush1.msra.mxu0 0.0
  %1509 = vmatprep.subr.mxu0 0.0
  %1510 = vmatpush1.msra.mxu0 0.0
  %1511 = vmatprep.subr.mxu0 0.0
  %1512 = vmatpush1.msra.mxu0 0.0
  %1513 = vmatprep.subr.mxu0 0.0
  %1514 = vmatpush1.msra.mxu0 0.0
  %1515 = vmatprep.subr.mxu0 0.0
  %1516 = vmatpush1.msra.mxu0 0.0
  %1517 = vmatprep.subr.mxu0 0.0
  %1518 = vmatpush1.msra.mxu0 0.0
  %1519 = vmatprep.subr.mxu0 0.0
  %1520 = vmatpush1.msra.mxu0 0.0
  %1521 = vmatprep.subr.mxu0 0.0
  %1522 = vmatpush1.msra.mxu0 0.0
  %1523 = vmatprep.subr.mxu0 0.0
  %1524 = vmatpush1.msra.mxu0 0.0
  %1525 = vmatprep.subr.mxu0 0.0
  %1526 = vmatpush1.msra.mxu0 0.0
  %1527 = vmatprep.subr.mxu0 0.0
  %1528 = vmatpush1.msra.mxu0 0.0
  %1529 = vmatprep.subr.mxu0 0.0
  %1530 = vmatpush1.msra.mxu0 0.0
  %1531 = vmatprep.subr.mxu0 0.0
  %1532 = vmatpush1.msra.mxu0 0.0
  %1533 = vmatprep.subr.mxu0 0.0
  %1534 = vmatpush1.msra.mxu0 %v1488
  %1535 = vmatprep.subr.mxu0 0.0
  %1536 = vmatpush1.msra.mxu0 %v1487
  %1537 = vmatprep.subr.mxu0 0.0
  %1538 = vmatpush2.msra.mxu0 0.0
  %1539 = vmatprep.subr.mxu0 0.0
  %1540 = vmatpush2.msra.mxu0 0.0
  %1541 = vmatprep.subr.mxu0 0.0
  %1542 = vmatpush2.msra.mxu0 0.0
  %1543 = vmatprep.subr.mxu0 0.0
  %1544 = vmatpush2.msra.mxu0 0.0
  %1545 = vmatprep.subr.mxu0 0.0
  %1546 = vmatpush2.msra.mxu0 0.0
  %1547 = vmatprep.subr.mxu0 0.0
  %1548 = vmatpush2.msra.mxu0 0.0
  %1549 = vmatprep.subr.mxu0 0.0
  %1550 = vmatpush2.msra.mxu0 0.0
  %1551 = vmatprep.subr.mxu0 0.0
  %1552 = vmatpush2.msra.mxu0 0.0
  %1553 = vmatprep.subr.mxu0 0.0
  %1554 = vmatpush2.msra.mxu0 0.0
  %1555 = vmatprep.subr.mxu0 0.0
  %1556 = vmatpush2.msra.mxu0 0.0
  %1557 = vmatprep.subr.mxu0 0.0
  %1558 = vmatpush2.msra.mxu0 0.0
  %1559 = vmatprep.subr.mxu0 0.0
  %1560 = vmatpush2.msra.mxu0 0.0
  %1561 = vmatprep.subr.mxu0 0.0
  %1562 = vmatpush2.msra.mxu0 0.0
  %1563 = vmatprep.subr.mxu0 0.0
  %1564 = vmatpush2.msra.mxu0 0.0
  %1565 = vmatprep.subr.mxu0 0.0
  %1566 = vmatpush2.msra.mxu0 0.0
  %1567 = vmatprep.subr.mxu0 0.0
  %1568 = vmatpush2.msra.mxu0 0.0
  %1569 = vmatprep.mubr.f32.mxu0 0.0
  %1570 = vmatmul.mubr.f32.gmra.mxu0 %v1497
  %v1571 = vpop.f32.mrf.mxu0
  %v1572 = vadd.f32 %v1494, %v1571
  %v1573 = vpop.f32.mrf.mxu0
  %1574 = vmatprep.mubr.f32.mxu0 0.0
  %1575 = vmatmul.mubr.f32.gmra.mxu0 %v1500
  %v1576 = vpop.f32.mrf.mxu0
  %v1577 = vadd.f32 %v1494, %v1576
  %v1578 = vpop.f32.mrf.mxu0
  %1579 = vmatprep.mubr.f32.mxu0 0.0
  %1580 = vmatmul.mubr.f32.gmra.mxu0 %v1503
  %v1581 = vpop.f32.mrf.mxu0
  %v1582 = vadd.f32 %v1494, %v1581
  %v1583 = vpop.f32.mrf.mxu0
  %1584 = vdwg.mxu0
  %1585 = vst [vmem:[%s20] sm:$0xff] %v1572
  %1586 = vst [vmem:[%s20 + $0x8] sm:$0xff] %v1577
  %1587 = vst [vmem:[%s20 + $0x10] sm:$0xff] %v1582
  // Predicated region
  $region82: #{gnn_forward.1} parent=0 // pred_check
    _
  $region83: #{gnn_forward.1} parent=0 // pred_check_branch
    %1589 = sbr.rel (0) target = $region85
  $region84: #{gnn_forward.1} parent=0 // pred_region
    _
  $region85: #{gnn_forward.1} parent=0 // pred_fallthru
    _
  // Predicated region
  $region86: #{gnn_forward.1} parent=0 // pred_check
    _
  $region87: #{gnn_forward.1} parent=0 // pred_check_branch
    %1591 = sbr.rel (0) target = $region89
  $region88: #{gnn_forward.1} parent=0 // pred_region
    _
  $region89: #{gnn_forward.1} parent=0 // pred_fallthru
    _

</llo_original>
